<compile_context>
chip_gen: v7x
topology: tpu7x:2x2x1
jax: 0.10.0
libtpu: 0.0.40
codegen_flags: <defaults>
</compile_context>

<pallas_src>
import functools

import jax
import jax.numpy as jnp
from jax import lax
from jax.experimental import pallas as pl
from jax.experimental.pallas import tpu as pltpu


LN_EPS = 1e-5
_LANE = 128


def _round_up(x: int, m: int) -> int:
    return ((x + m - 1) // m) * m


def _cdiv(a: int, b: int) -> int:
    return -(-a // b)


def _layernorm(h, gamma, beta, hidden_dim: int):
    """LayerNorm over the true hidden dim. Padded lanes of h are exactly 0 by
    construction, so sum(h) / sum(h*h) over the padded width are already the
    true-lane sums; divide by the true hidden_dim."""
    inv_n = 1.0 / float(hidden_dim)
    mean = jnp.sum(h, axis=-1, keepdims=True) * inv_n
    ex2 = jnp.sum(h * h, axis=-1, keepdims=True) * inv_n
    var = jnp.maximum(ex2 - mean * mean, 0.0)
    # gamma/beta are zero on padded lanes -> normalized padded lanes stay 0.
    return (h - mean) * lax.rsqrt(var + LN_EPS) * gamma + beta


# ----------------------------------------------------------------------------
# Kernels
# ----------------------------------------------------------------------------
def _resmlp_resident_kernel(
    x_ref,        # (TB, Dip)     matmul dtype (bf16)
    w_in_ref,     # (Dip, Hp)     matmul dtype
    b_in_ref,     # (1, Hp)       f32
    w1_ref,       # (NB, Hp, Hp)  matmul dtype
    b1_ref,       # (NB, 1, Hp)   f32
    w2_ref,       # (NB, Hp, Hp)  matmul dtype
    b2_ref,       # (NB, 1, Hp)   f32
    gamma_ref,    # (1, Hp)       f32
    beta_ref,     # (1, Hp)       f32
    w_out_ref,    # (Hp, Dop)     matmul dtype
    b_out_ref,    # (1, Dop)      f32
    o_ref,        # (TB, Dop)
    *,
    num_blocks: int,
    hidden_dim: int,
):
    mm_dtype = w1_ref.dtype

    # Input projection (MXU, fp32 accumulate).
    h = jnp.dot(x_ref[...], w_in_ref[...],
                preferred_element_type=jnp.float32) + b_in_ref[...]

    def block(i, h):
        t = jnp.dot(h.astype(mm_dtype), w1_ref[i], preferred_element_type=jnp.float32)
        t = jnp.maximum(t + b1_ref[i], 0.0)                                   # ReLU
        t = jnp.dot(t.astype(mm_dtype), w2_ref[i], preferred_element_type=jnp.float32)
        return h + t + b2_ref[i]                                              # residual

    # fori_loop bounds vreg live ranges; unroll short loops for LLO visibility.
    h = lax.fori_loop(0, num_blocks, block, h, unroll=(num_blocks <= 8))

    h = _layernorm(h, gamma_ref[...], beta_ref[...], hidden_dim)

    y = jnp.dot(h.astype(mm_dtype), w_out_ref[...],
                preferred_element_type=jnp.float32) + b_out_ref[...]
    o_ref[...] = y.astype(o_ref.dtype)


def _resmlp_stream_kernel(
    x_ref,        # (TB, Dip)
    w_in_ref,     # (Dip, Hp)
    b_in_ref,     # (1, Hp)
    w1_ref,       # (1, Hp, Hp)   current block's weights (streamed over grid axis 1)
    b1_ref,       # (1, 1, Hp)
    w2_ref,       # (1, Hp, Hp)
    b2_ref,       # (1, 1, Hp)
    gamma_ref,    # (1, Hp)
    beta_ref,     # (1, Hp)
    w_out_ref,    # (Hp, Dop)
    b_out_ref,    # (1, Dop)
    o_ref,        # (TB, Dop)
    h_ref,        # (TB, Hp) f32 scratch carrying h across block steps
    *,
    hidden_dim: int,
):
    k = pl.program_id(1)
    mm_dtype = w1_ref.dtype

    @pl.when(k == 0)
    def _():
        h_ref[...] = jnp.dot(x_ref[...], w_in_ref[...],
                             preferred_element_type=jnp.float32) + b_in_ref[...]

    h = h_ref[...]
    t = jnp.dot(h.astype(mm_dtype), w1_ref[0], preferred_element_type=jnp.float32)
    t = jnp.maximum(t + b1_ref[0], 0.0)
    t = jnp.dot(t.astype(mm_dtype), w2_ref[0], preferred_element_type=jnp.float32)
    h = h + t + b2_ref[0]
    h_ref[...] = h

    @pl.when(k == pl.num_programs(1) - 1)
    def _():
        hn = _layernorm(h, gamma_ref[...], beta_ref[...], hidden_dim)
        y = jnp.dot(hn.astype(mm_dtype), w_out_ref[...],
                    preferred_element_type=jnp.float32) + b_out_ref[...]
        o_ref[...] = y.astype(o_ref.dtype)


# ----------------------------------------------------------------------------
# Wrapper
# ----------------------------------------------------------------------------
def prepare_params(params, *, matmul_dtype=jnp.bfloat16):
    """One-time padding (feature dims -> multiples of 128) and bf16 casting of
    the weights.  Do this once and reuse; only x is padded per call."""
    d_in, H = params["w_in"].shape
    d_out = params["w_out"].shape[1]
    num_blocks = params["w1"].shape[0]
    assert num_blocks >= 1
    d_in_p = _round_up(d_in, _LANE)
    hp = _round_up(H, _LANE)
    d_out_p = _round_up(d_out, _LANE)

    def pad2(a, r, c, dt=None):
        a = jnp.pad(a, ((0, r - a.shape[0]), (0, c - a.shape[1])))
        return a.astype(dt) if dt is not None else a

    def pad3(a, r, c, dt=None):
        a = jnp.pad(a, ((0, 0), (0, r - a.shape[1]), (0, c - a.shape[2])))
        return a.astype(dt) if dt is not None else a

    # NOTE: zero padding of weight columns/rows and biases/gamma/beta is what
    # keeps padded lanes of h exactly 0 -> LayerNorm statistics stay correct.
    return {
        "w_in": pad2(params["w_in"], d_in_p, hp, matmul_dtype),
        "b_in": pad2(params["b_in"], 1, hp),
        "w1": pad3(params["w1"], hp, hp, matmul_dtype),
        "b1": pad3(params["b1"], 1, hp),
        "w2": pad3(params["w2"], hp, hp, matmul_dtype),
        "b2": pad3(params["b2"], 1, hp),
        "ln_gamma": pad2(params["ln_gamma"], 1, hp),
        "ln_beta": pad2(params["ln_beta"], 1, hp),
        "w_out": pad2(params["w_out"], hp, d_out_p, matmul_dtype),
        "b_out": pad2(params["b_out"], 1, d_out_p),
        "_meta": dict(d_in=d_in, hidden=H, d_out=d_out, num_blocks=num_blocks,
                      d_in_p=d_in_p, hp=hp, d_out_p=d_out_p),
    }


def _vmem_budget_bytes() -> int:
    try:
        cap = int(pltpu.get_tpu_info().vmem_capacity_bytes)
    except Exception:
        cap = 64 * 1024 * 1024  # conservative (v7x per-TC size)
    # Leave ~15% headroom for Mosaic internal scratch / pipeline bookkeeping.
    return int(cap * 0.85)


def resmlp_transition(x, params, *, block_batch=None, out_dtype=None,
                      force_streaming: bool = False):
    """Residual-MLP transition forward pass via Pallas TPU kernels.

    x: (B, input_dim) float32
    params: raw param dict (see init_params) or output of prepare_params().
    """
    if "_meta" not in params:
        params = prepare_params(params)
    meta = params["_meta"]
    d_in, H, d_out = meta["d_in"], meta["hidden"], meta["d_out"]
    num_blocks = meta["num_blocks"]
    d_in_p, hp, d_out_p = meta["d_in_p"], meta["hp"], meta["d_out_p"]
    mm_dtype = params["w1"].dtype
    mm_isz = jnp.dtype(mm_dtype).itemsize
    out_dtype = x.dtype if out_dtype is None else jnp.dtype(out_dtype)
    out_isz = jnp.dtype(out_dtype).itemsize

    B = x.shape[0]
    budget = _vmem_budget_bytes()

    # Larger batch tiles on 128 MiB-VMEM parts (v5e/v6e); 256 on v7x.
    if block_batch is None:
        block_batch = 512 if budget >= (96 << 20) else 256

    # Balanced batch tiles; at least 2 grid steps when B > 8 so both v7x TCs
    # get work (no-op on 1-TC parts).
    if _round_up(B, 8) <= 8:
        tb = 8
    else:
        ntiles = max(2, _cdiv(B, block_batch))
        tb = _round_up(_cdiv(B, ntiles), 8)
    bp = _round_up(B, tb)
    nbt = bp // tb

    slack = 4 << 20
    big_w = 2 * num_blocks * hp * hp * mm_isz                       # stacked w1+w2
    small_w = ((d_in_p * hp + hp * d_out_p) * mm_isz
               + (2 * num_blocks * hp + 4 * hp + d_out_p) * 4)      # biases/gamma/beta/w_in/w_out
    def act_bytes(t):
        return 2 * t * d_in_p * mm_isz + 2 * t * d_out_p * out_isz  # x/o double buffers
    def interm_bytes(t):
        return 3 * t * hp * 4                                       # f32 h/t intermediates

    resident_need = big_w + small_w + act_bytes(tb) + interm_bytes(tb) + slack
    use_streaming = force_streaming or resident_need > budget

    if use_streaming:
        # Streaming keeps only ~2 blocks of (Hp,Hp) weights in flight.
        def stream_need(t):
            return (2 * (2 * hp * hp * mm_isz) + 2 * (2 * hp * 4) + small_w
                    + act_bytes(t) + t * hp * 4 + interm_bytes(t) + slack)
        # If even streaming is tight, shrink the batch tile (never grow residency).
        while tb > 8 and stream_need(tb) > budget:
            tb = _round_up(max(8, tb // 2), 8)
        bp = _round_up(B, tb)
        nbt = bp // tb

    # Pad x per call (weights are already padded/cast once in prepare_params).
    x_p = jnp.pad(x, ((0, bp - B), (0, d_in_p - d_in))).astype(mm_dtype)

    args = (x_p, params["w_in"], params["b_in"], params["w1"], params["b1"],
            params["w2"], params["b2"], params["ln_gamma"], params["ln_beta"],
            params["w_out"], params["b_out"])

    flops = 2 * bp * hp * (d_in_p + 2 * num_blocks * hp + d_out_p)
    w_bytes_read = big_w * (nbt if use_streaming else 1) + small_w
    bytes_accessed = bp * d_in_p * mm_isz + w_bytes_read + bp * d_out_p * out_isz
    cost = pl.CostEstimate(flops=int(flops), transcendentals=int(bp),
                           bytes_accessed=int(bytes_accessed))

    def const_spec(shape):
        n = len(shape)
        # Grid-invariant block: single-buffered (no re-fetch, no double residency).
        return pl.BlockSpec(shape, lambda *_: (0,) * n, pipeline_mode=pl.Buffered(1))

    if not use_streaming:
        kernel = functools.partial(_resmlp_resident_kernel,
                                   num_blocks=num_blocks, hidden_dim=H)
        in_specs = [
            pl.BlockSpec((tb, d_in_p), lambda i: (i, 0)),        # x tile (pipelined)
            const_spec((d_in_p, hp)),                            # w_in
            const_spec((1, hp)),                                 # b_in
            const_spec((num_blocks, hp, hp)),                    # w1
            const_spec((num_blocks, 1, hp)),                     # b1
            const_spec((num_blocks, hp, hp)),                    # w2
            const_spec((num_blocks, 1, hp)),                     # b2
            const_spec((1, hp)),                                 # gamma
            const_spec((1, hp)),                                 # beta
            const_spec((hp, d_out_p)),                           # w_out
            const_spec((1, d_out_p)),                            # b_out
        ]
        y = pl.pallas_call(
            kernel,
            out_shape=jax.ShapeDtypeStruct((bp, d_out_p), out_dtype),
            grid=(nbt,),
            in_specs=in_specs,
            out_specs=pl.BlockSpec((tb, d_out_p), lambda i: (i, 0)),
            compiler_params=pltpu.CompilerParams(
                dimension_semantics=("parallel",),
                vmem_limit_bytes=budget,
            ),
            cost_estimate=cost,
        )(*args)
    else:
        kernel = functools.partial(_resmlp_stream_kernel, hidden_dim=H)
        in_specs = [
            pl.BlockSpec((tb, d_in_p), lambda i, k: (i, 0)),     # x tile
            const_spec((d_in_p, hp)),                            # w_in
            const_spec((1, hp)),                                 # b_in
            pl.BlockSpec((1, hp, hp), lambda i, k: (k, 0, 0)),   # w1[k] (streamed)
            pl.BlockSpec((1, 1, hp), lambda i, k: (k, 0, 0)),    # b1[k]
            pl.BlockSpec((1, hp, hp), lambda i, k: (k, 0, 0)),   # w2[k] (streamed)
            pl.BlockSpec((1, 1, hp), lambda i, k: (k, 0, 0)),    # b2[k]
            const_spec((1, hp)),                                 # gamma
            const_spec((1, hp)),                                 # beta
            const_spec((hp, d_out_p)),                           # w_out
            const_spec((1, d_out_p)),                            # b_out
        ]
        y = pl.pallas_call(
            kernel,
            out_shape=jax.ShapeDtypeStruct((bp, d_out_p), out_dtype),
            grid=(nbt, num_blocks),
            in_specs=in_specs,
            out_specs=pl.BlockSpec((tb, d_out_p), lambda i, k: (i, 0)),
            scratch_shapes=[pltpu.VMEM((tb, hp), jnp.float32)],
            compiler_params=pltpu.CompilerParams(
                dimension_semantics=("parallel", "arbitrary"),
                vmem_limit_bytes=budget,
            ),
            cost_estimate=cost,
        )(*args)

    return y[:B, :d_out]


# ----------------------------------------------------------------------------
# Params / reference
# ----------------------------------------------------------------------------
def init_params(key, input_dim, output_dim, hidden_dim, num_blocks):
    """Deterministic synthetic parameters (weights stored as (in, out))."""
    ks = jax.random.split(key, 8)
    s = 0.1
    return {
        "w_in": s * jax.random.normal(ks[0], (input_dim, hidden_dim), jnp.float32),
        "b_in": s * jax.random.normal(ks[1], (1, hidden_dim), jnp.float32),
        "w1": s * jax.random.normal(ks[2], (num_blocks, hidden_dim, hidden_dim), jnp.float32),
        "b1": s * jax.random.normal(ks[3], (num_blocks, 1, hidden_dim), jnp.float32),
        "w2": s * jax.random.normal(ks[4], (num_blocks, hidden_dim, hidden_dim), jnp.float32),
        "b2": s * jax.random.normal(ks[5], (num_blocks, 1, hidden_dim), jnp.float32),
        "ln_gamma": jnp.ones((1, hidden_dim), jnp.float32),
        "ln_beta": jnp.zeros((1, hidden_dim), jnp.float32),
        "w_out": s * jax.random.normal(ks[6], (hidden_dim, output_dim), jnp.float32),
        "b_out": s * jax.random.normal(ks[7], (1, output_dim), jnp.float32),
    }


def resmlp_reference(x, params, *, num_blocks):
    """Pure-JAX fp32 reference for correctness checking."""
    h = x @ params["w_in"] + params["b_in"]
    for i in range(num_blocks):
        t = jnp.maximum(h @ params["w1"][i] + params["b1"][i], 0.0)
        t = t @ params["w2"][i] + params["b2"][i]
        h = h + t
    mean = jnp.mean(h, axis=-1, keepdims=True)
    var = jnp.mean((h - mean) ** 2, axis=-1, keepdims=True)
    h = (h - mean) * jax.lax.rsqrt(var + LN_EPS)
    h = h * params["ln_gamma"] + params["ln_beta"]
    return h @ params["w_out"] + params["b_out"]


if __name__ == "__main__":
    # Small shapes consistent with the module: x is (batch, input_dim).
    batch, input_dim, output_dim, hidden_dim, num_blocks = 16, 16, 8, 32, 2

    key = jax.random.PRNGKey(0)
    kx, kp = jax.random.split(key)
    x = jax.random.normal(kx, (batch, input_dim), jnp.float32)
    params = init_params(kp, input_dim, output_dim, hidden_dim, num_blocks)

    # Pad / cast the weights exactly once (per-call wrapper only pads x).
    prepared = prepare_params(params)
    ref = resmlp_reference(x, params, num_blocks=num_blocks)

    # Resident-weight path.
    out = jax.block_until_ready(resmlp_transition(x, prepared))
    assert out.shape == (batch, output_dim)
    # bf16 matmul operands (fp32 accumulation) vs pure-fp32 reference.
    assert jnp.allclose(out, ref, atol=3e-2, rtol=3e-2), "resident path mismatch"

    # Weight-streaming path (exercised explicitly; auto-selected when the
    # stacked block weights would not fit the per-core VMEM budget).
    out_s = jax.block_until_ready(resmlp_transition(x, prepared, force_streaming=True))
    assert out_s.shape == (batch, output_dim)
    assert jnp.allclose(out_s, ref, atol=3e-2, rtol=3e-2), "streaming path mismatch"

    print("KERNEL_OK")
</pallas_src>

<mosaic_0001>
module attributes {stable_mosaic.version = 11 : i64} {
  func.func @_resmlp_resident_kernel(%arg0: i32, %arg1: memref<8x128xbf16, #tpu.memory_space<vmem>>, %arg2: memref<128x128xbf16, #tpu.memory_space<vmem>>, %arg3: memref<1x128xf32, #tpu.memory_space<vmem>>, %arg4: memref<2x128x128xbf16, #tpu.memory_space<vmem>>, %arg5: memref<2x1x128xf32, #tpu.memory_space<vmem>>, %arg6: memref<2x128x128xbf16, #tpu.memory_space<vmem>>, %arg7: memref<2x1x128xf32, #tpu.memory_space<vmem>>, %arg8: memref<1x128xf32, #tpu.memory_space<vmem>>, %arg9: memref<1x128xf32, #tpu.memory_space<vmem>>, %arg10: memref<128x128xbf16, #tpu.memory_space<vmem>>, %arg11: memref<1x128xf32, #tpu.memory_space<vmem>>, %arg12: memref<8x128xf32, #tpu.memory_space<vmem>>) attributes {dimension_semantics = [#tpu.dimension_semantics<parallel>], iteration_bounds = array<i64: 2>, scalar_prefetch = 0 : i64, scratch_operands = 0 : i64, tpu.core_type = #tpu.core_type<tc>, window_params = [{transform_indices = @transform_0, window_bounds = array<i64: 8, 128>}, {pipeline_mode = #tpu.pipeline_mode<synchronous>, transform_indices = @transform_1, window_bounds = array<i64: 128, 128>}, {pipeline_mode = #tpu.pipeline_mode<synchronous>, transform_indices = @transform_2, window_bounds = array<i64: 1, 128>}, {pipeline_mode = #tpu.pipeline_mode<synchronous>, transform_indices = @transform_3, window_bounds = array<i64: 2, 128, 128>}, {pipeline_mode = #tpu.pipeline_mode<synchronous>, transform_indices = @transform_4, window_bounds = array<i64: 2, 1, 128>}, {pipeline_mode = #tpu.pipeline_mode<synchronous>, transform_indices = @transform_5, window_bounds = array<i64: 2, 128, 128>}, {pipeline_mode = #tpu.pipeline_mode<synchronous>, transform_indices = @transform_6, window_bounds = array<i64: 2, 1, 128>}, {pipeline_mode = #tpu.pipeline_mode<synchronous>, transform_indices = @transform_7, window_bounds = array<i64: 1, 128>}, {pipeline_mode = #tpu.pipeline_mode<synchronous>, transform_indices = @transform_8, window_bounds = array<i64: 1, 128>}, {pipeline_mode = #tpu.pipeline_mode<synchronous>, transform_indices = @transform_9, window_bounds = array<i64: 128, 128>}, {pipeline_mode = #tpu.pipeline_mode<synchronous>, transform_indices = @transform_10, window_bounds = array<i64: 1, 128>}, {transform_indices = @transform_11, window_bounds = array<i64: 8, 128>}]} {
    %c0 = arith.constant 0 : index
    %c0_0 = arith.constant 0 : index
    %0 = vector.load %arg1[%c0, %c0_0] : memref<8x128xbf16, #tpu.memory_space<vmem>>, vector<8x128xbf16>
    %c0_1 = arith.constant 0 : index
    %c0_2 = arith.constant 0 : index
    %1 = vector.load %arg2[%c0_1, %c0_2] : memref<128x128xbf16, #tpu.memory_space<vmem>>, vector<128x128xbf16>
    %cst = arith.constant dense<0.000000e+00> : vector<8x128xf32>
    %2 = tpu.matmul %0, %1, %cst {dimension_numbers = #tpu.dot_dimension_numbers<[1], [0], [0], [1], [0, 0, 1, 1], [], []>} : vector<8x128xbf16>, vector<128x128xbf16>, vector<8x128xf32> -> vector<8x128xf32>
    %c0_3 = arith.constant 0 : index
    %c0_4 = arith.constant 0 : index
    %3 = vector.load %arg3[%c0_3, %c0_4] : memref<1x128xf32, #tpu.memory_space<vmem>>, vector<1x128xf32>
    %4 = vector.broadcast %3 : vector<1x128xf32> to vector<8x128xf32>
    %5 = arith.addf %2, %4 : vector<8x128xf32>
    %c0_i32 = arith.constant 0 : i32
    %6 = arith.truncf %5 : vector<8x128xf32> to vector<8x128xbf16>
    %7 = arith.index_cast %c0_i32 : i32 to index
    %c0_5 = arith.constant 0 : index
    %c0_6 = arith.constant 0 : index
    %8 = vector.load %arg4[%7, %c0_5, %c0_6] : memref<2x128x128xbf16, #tpu.memory_space<vmem>>, vector<1x128x128xbf16>
    %9 = vector.shape_cast %8 : vector<1x128x128xbf16> to vector<128x128xbf16>
    %cst_7 = arith.constant dense<0.000000e+00> : vector<8x128xf32>
    %10 = tpu.matmul %6, %9, %cst_7 {dimension_numbers = #tpu.dot_dimension_numbers<[1], [0], [0], [1], [0, 0, 1, 1], [], []>} : vector<8x128xbf16>, vector<128x128xbf16>, vector<8x128xf32> -> vector<8x128xf32>
    %11 = arith.index_cast %c0_i32 : i32 to index
    %c0_8 = arith.constant 0 : index
    %c0_9 = arith.constant 0 : index
    %12 = vector.load %arg5[%11, %c0_8, %c0_9] : memref<2x1x128xf32, #tpu.memory_space<vmem>>, vector<1x1x128xf32>
    %13 = vector.shape_cast %12 : vector<1x1x128xf32> to vector<1x128xf32>
    %14 = vector.broadcast %13 : vector<1x128xf32> to vector<8x128xf32>
    %15 = arith.addf %10, %14 : vector<8x128xf32>
    %cst_10 = arith.constant 0.000000e+00 : f32
    %16 = vector.broadcast %cst_10 : f32 to vector<8x128xf32>
    %17 = arith.maximumf %15, %16 : vector<8x128xf32>
    %18 = arith.truncf %17 : vector<8x128xf32> to vector<8x128xbf16>
    %19 = arith.index_cast %c0_i32 : i32 to index
    %c0_11 = arith.constant 0 : index
    %c0_12 = arith.constant 0 : index
    %20 = vector.load %arg6[%19, %c0_11, %c0_12] : memref<2x128x128xbf16, #tpu.memory_space<vmem>>, vector<1x128x128xbf16>
    %21 = vector.shape_cast %20 : vector<1x128x128xbf16> to vector<128x128xbf16>
    %cst_13 = arith.constant dense<0.000000e+00> : vector<8x128xf32>
    %22 = tpu.matmul %18, %21, %cst_13 {dimension_numbers = #tpu.dot_dimension_numbers<[1], [0], [0], [1], [0, 0, 1, 1], [], []>} : vector<8x128xbf16>, vector<128x128xbf16>, vector<8x128xf32> -> vector<8x128xf32>
    %23 = arith.addf %5, %22 : vector<8x128xf32>
    %24 = arith.index_cast %c0_i32 : i32 to index
    %c0_14 = arith.constant 0 : index
    %c0_15 = arith.constant 0 : index
    %25 = vector.load %arg7[%24, %c0_14, %c0_15] : memref<2x1x128xf32, #tpu.memory_space<vmem>>, vector<1x1x128xf32>
    %26 = vector.shape_cast %25 : vector<1x1x128xf32> to vector<1x128xf32>
    %27 = vector.broadcast %26 : vector<1x128xf32> to vector<8x128xf32>
    %28 = arith.addf %23, %27 : vector<8x128xf32>
    %c1_i32 = arith.constant 1 : i32
    %29 = arith.truncf %28 : vector<8x128xf32> to vector<8x128xbf16>
    %30 = arith.index_cast %c1_i32 : i32 to index
    %c0_16 = arith.constant 0 : index
    %c0_17 = arith.constant 0 : index
    %31 = vector.load %arg4[%30, %c0_16, %c0_17] : memref<2x128x128xbf16, #tpu.memory_space<vmem>>, vector<1x128x128xbf16>
    %32 = vector.shape_cast %31 : vector<1x128x128xbf16> to vector<128x128xbf16>
    %cst_18 = arith.constant dense<0.000000e+00> : vector<8x128xf32>
    %33 = tpu.matmul %29, %32, %cst_18 {dimension_numbers = #tpu.dot_dimension_numbers<[1], [0], [0], [1], [0, 0, 1, 1], [], []>} : vector<8x128xbf16>, vector<128x128xbf16>, vector<8x128xf32> -> vector<8x128xf32>
    %34 = arith.index_cast %c1_i32 : i32 to index
    %c0_19 = arith.constant 0 : index
    %c0_20 = arith.constant 0 : index
    %35 = vector.load %arg5[%34, %c0_19, %c0_20] : memref<2x1x128xf32, #tpu.memory_space<vmem>>, vector<1x1x128xf32>
    %36 = vector.shape_cast %35 : vector<1x1x128xf32> to vector<1x128xf32>
    %37 = vector.broadcast %36 : vector<1x128xf32> to vector<8x128xf32>
    %38 = arith.addf %33, %37 : vector<8x128xf32>
    %cst_21 = arith.constant 0.000000e+00 : f32
    %39 = vector.broadcast %cst_21 : f32 to vector<8x128xf32>
    %40 = arith.maximumf %38, %39 : vector<8x128xf32>
    %41 = arith.truncf %40 : vector<8x128xf32> to vector<8x128xbf16>
    %42 = arith.index_cast %c1_i32 : i32 to index
    %c0_22 = arith.constant 0 : index
    %c0_23 = arith.constant 0 : index
    %43 = vector.load %arg6[%42, %c0_22, %c0_23] : memref<2x128x128xbf16, #tpu.memory_space<vmem>>, vector<1x128x128xbf16>
    %44 = vector.shape_cast %43 : vector<1x128x128xbf16> to vector<128x128xbf16>
    %cst_24 = arith.constant dense<0.000000e+00> : vector<8x128xf32>
    %45 = tpu.matmul %41, %44, %cst_24 {dimension_numbers = #tpu.dot_dimension_numbers<[1], [0], [0], [1], [0, 0, 1, 1], [], []>} : vector<8x128xbf16>, vector<128x128xbf16>, vector<8x128xf32> -> vector<8x128xf32>
    %46 = arith.addf %28, %45 : vector<8x128xf32>
    %47 = arith.index_cast %c1_i32 : i32 to index
    %c0_25 = arith.constant 0 : index
    %c0_26 = arith.constant 0 : index
    %48 = vector.load %arg7[%47, %c0_25, %c0_26] : memref<2x1x128xf32, #tpu.memory_space<vmem>>, vector<1x1x128xf32>
    %49 = vector.shape_cast %48 : vector<1x1x128xf32> to vector<1x128xf32>
    %50 = vector.broadcast %49 : vector<1x128xf32> to vector<8x128xf32>
    %51 = arith.addf %46, %50 : vector<8x128xf32>
    %c2_i32 = arith.constant 2 : i32
    %c0_27 = arith.constant 0 : index
    %c0_28 = arith.constant 0 : index
    %52 = vector.load %arg8[%c0_27, %c0_28] : memref<1x128xf32, #tpu.memory_space<vmem>>, vector<1x128xf32>
    %c0_29 = arith.constant 0 : index
    %c0_30 = arith.constant 0 : index
    %53 = vector.load %arg9[%c0_29, %c0_30] : memref<1x128xf32, #tpu.memory_space<vmem>>, vector<1x128xf32>
    %cst_31 = arith.constant dense<0.000000e+00> : vector<8xf32>
    %54 = vector.multi_reduction <add>, %51, %cst_31 [1] : vector<8x128xf32> to vector<8xf32>
    %55 = vector.shape_cast %54 : vector<8xf32> to vector<8x1xf32>
    %cst_32 = arith.constant 3.125000e-02 : f32
    %56 = vector.broadcast %cst_32 : f32 to vector<8x1xf32>
    %57 = arith.mulf %55, %56 : vector<8x1xf32>
    %58 = arith.mulf %51, %51 : vector<8x128xf32>
    %cst_33 = arith.constant dense<0.000000e+00> : vector<8xf32>
    %59 = vector.multi_reduction <add>, %58, %cst_33 [1] : vector<8x128xf32> to vector<8xf32>
    %60 = vector.shape_cast %59 : vector<8xf32> to vector<8x1xf32>
    %cst_34 = arith.constant 3.125000e-02 : f32
    %61 = vector.broadcast %cst_34 : f32 to vector<8x1xf32>
    %62 = arith.mulf %60, %61 : vector<8x1xf32>
    %63 = arith.mulf %57, %57 : vector<8x1xf32>
    %64 = arith.subf %62, %63 : vector<8x1xf32>
    %cst_35 = arith.constant 0.000000e+00 : f32
    %65 = vector.broadcast %cst_35 : f32 to vector<8x1xf32>
    %66 = arith.maximumf %64, %65 : vector<8x1xf32>
    %67 = vector.broadcast %57 : vector<8x1xf32> to vector<8x128xf32>
    %68 = arith.subf %51, %67 : vector<8x128xf32>
    %cst_36 = arith.constant 9.99999974E-6 : f32
    %69 = vector.broadcast %cst_36 : f32 to vector<8x1xf32>
    %70 = arith.addf %66, %69 : vector<8x1xf32>
    %71 = math.rsqrt %70 : vector<8x1xf32>
    %72 = vector.broadcast %71 : vector<8x1xf32> to vector<8x128xf32>
    %73 = arith.mulf %68, %72 : vector<8x128xf32>
    %74 = vector.broadcast %52 : vector<1x128xf32> to vector<8x128xf32>
    %75 = arith.mulf %73, %74 : vector<8x128xf32>
    %76 = vector.broadcast %53 : vector<1x128xf32> to vector<8x128xf32>
    %77 = arith.addf %75, %76 : vector<8x128xf32>
    %78 = arith.truncf %77 : vector<8x128xf32> to vector<8x128xbf16>
    %c0_37 = arith.constant 0 : index
    %c0_38 = arith.constant 0 : index
    %79 = vector.load %arg10[%c0_37, %c0_38] : memref<128x128xbf16, #tpu.memory_space<vmem>>, vector<128x128xbf16>
    %cst_39 = arith.constant dense<0.000000e+00> : vector<8x128xf32>
    %80 = tpu.matmul %78, %79, %cst_39 {dimension_numbers = #tpu.dot_dimension_numbers<[1], [0], [0], [1], [0, 0, 1, 1], [], []>} : vector<8x128xbf16>, vector<128x128xbf16>, vector<8x128xf32> -> vector<8x128xf32>
    %c0_40 = arith.constant 0 : index
    %c0_41 = arith.constant 0 : index
    %81 = vector.load %arg11[%c0_40, %c0_41] : memref<1x128xf32, #tpu.memory_space<vmem>>, vector<1x128xf32>
    %82 = vector.broadcast %81 : vector<1x128xf32> to vector<8x128xf32>
    %83 = arith.addf %80, %82 : vector<8x128xf32>
    %c0_42 = arith.constant 0 : index
    %c0_43 = arith.constant 0 : index
    %84 = vector.load %arg12[%c0_42, %c0_43] : memref<8x128xf32, #tpu.memory_space<vmem>>, vector<8x128xf32>
    tpu.vector_store %arg12[%c0_42, %c0_43], %83 {strides = array<i32>} : memref<8x128xf32, #tpu.memory_space<vmem>>, vector<8x128xf32>,
    return
  }
  func.func @transform_0(%arg0: i32) -> (i32, i32) {
    %c0_i32 = arith.constant 0 : i32
    %c0_i32_0 = arith.constant 0 : i32
    return %arg0, %c0_i32 : i32, i32
  }
  func.func @transform_1(%arg0: i32) -> (i32, i32) {
    %c0_i32 = arith.constant 0 : i32
    %c0_i32_0 = arith.constant 0 : i32
    %c0_i32_1 = arith.constant 0 : i32
    return %c0_i32, %c0_i32_0 : i32, i32
  }
  func.func @transform_2(%arg0: i32) -> (i32, i32) {
    %c0_i32 = arith.constant 0 : i32
    %c0_i32_0 = arith.constant 0 : i32
    %c0_i32_1 = arith.constant 0 : i32
    return %c0_i32, %c0_i32_0 : i32, i32
  }
  func.func @transform_3(%arg0: i32) -> (i32, i32, i32) {
    %c0_i32 = arith.constant 0 : i32
    %c0_i32_0 = arith.constant 0 : i32
    %c0_i32_1 = arith.constant 0 : i32
    %c0_i32_2 = arith.constant 0 : i32
    return %c0_i32, %c0_i32_0, %c0_i32_1 : i32, i32, i32
  }
  func.func @transform_4(%arg0: i32) -> (i32, i32, i32) {
    %c0_i32 = arith.constant 0 : i32
    %c0_i32_0 = arith.constant 0 : i32
    %c0_i32_1 = arith.constant 0 : i32
    %c0_i32_2 = arith.constant 0 : i32
    return %c0_i32, %c0_i32_0, %c0_i32_1 : i32, i32, i32
  }
  func.func @transform_5(%arg0: i32) -> (i32, i32, i32) {
    %c0_i32 = arith.constant 0 : i32
    %c0_i32_0 = arith.constant 0 : i32
    %c0_i32_1 = arith.constant 0 : i32
    %c0_i32_2 = arith.constant 0 : i32
    return %c0_i32, %c0_i32_0, %c0_i32_1 : i32, i32, i32
  }
  func.func @transform_6(%arg0: i32) -> (i32, i32, i32) {
    %c0_i32 = arith.constant 0 : i32
    %c0_i32_0 = arith.constant 0 : i32
    %c0_i32_1 = arith.constant 0 : i32
    %c0_i32_2 = arith.constant 0 : i32
    return %c0_i32, %c0_i32_0, %c0_i32_1 : i32, i32, i32
  }
  func.func @transform_7(%arg0: i32) -> (i32, i32) {
    %c0_i32 = arith.constant 0 : i32
    %c0_i32_0 = arith.constant 0 : i32
    %c0_i32_1 = arith.constant 0 : i32
    return %c0_i32, %c0_i32_0 : i32, i32
  }
  func.func @transform_8(%arg0: i32) -> (i32, i32) {
    %c0_i32 = arith.constant 0 : i32
    %c0_i32_0 = arith.constant 0 : i32
    %c0_i32_1 = arith.constant 0 : i32
    return %c0_i32, %c0_i32_0 : i32, i32
  }
  func.func @transform_9(%arg0: i32) -> (i32, i32) {
    %c0_i32 = arith.constant 0 : i32
    %c0_i32_0 = arith.constant 0 : i32
    %c0_i32_1 = arith.constant 0 : i32
    return %c0_i32, %c0_i32_0 : i32, i32
  }
  func.func @transform_10(%arg0: i32) -> (i32, i32) {
    %c0_i32 = arith.constant 0 : i32
    %c0_i32_0 = arith.constant 0 : i32
    %c0_i32_1 = arith.constant 0 : i32
    return %c0_i32, %c0_i32_0 : i32, i32
  }
  func.func @transform_11(%arg0: i32) -> (i32, i32) {
    %c0_i32 = arith.constant 0 : i32
    %c0_i32_0 = arith.constant 0 : i32
    return %arg0, %c0_i32 : i32, i32
  }
}

</mosaic_0001>

<llo_original>
// kernel: tpu_custom_call.1
$region0: #{tpu_custom_call.1}
  #allocation0 [shape = 'u32[]', space=smem, size = 0x4, offset = 0x4, fixed_abs, tag = 'smem constant byte address 0x4 - core index']
  #allocation1 [shape = 'u32[144,128]{1,0:T(1,128)}', space=vmem, size = 0x12000, scoped, tag = 'internal scratch']
  %s0 = inlined_call_operand.hbm [shape: bf16[16,128], index: 0, kind: input, shape index: {}]
  %s1 = inlined_call_operand.hbm [shape: bf16[128,128], index: 1, kind: input, shape index: {}]
  %s2 = inlined_call_operand.vmem [shape: f32[1,128], index: 2, kind: input, shape index: {}]
  %s3 = inlined_call_operand.hbm [shape: bf16[2,128,128], index: 3, kind: input, shape index: {}]
  %s4 = inlined_call_operand.vmem [shape: f32[2,1,128], index: 4, kind: input, shape index: {}]
  %s5 = inlined_call_operand.hbm [shape: bf16[2,128,128], index: 5, kind: input, shape index: {}]
  %s6 = inlined_call_operand.vmem [shape: f32[2,1,128], index: 6, kind: input, shape index: {}]
  %s7 = inlined_call_operand.vmem [shape: f32[1,128], index: 7, kind: input, shape index: {}]
  %s8 = inlined_call_operand.vmem [shape: f32[1,128], index: 8, kind: input, shape index: {}]
  %s9 = inlined_call_operand.hbm [shape: bf16[128,128], index: 9, kind: input, shape index: {}]
  %s10 = inlined_call_operand.vmem [shape: f32[1,128], index: 10, kind: input, shape index: {}]
  %s11 = inlined_call_operand.hbm [shape: f32[16,128], index: 11, kind: output, shape index: {}]
  %s12 = sld [smem:[#allocation0]]
  $region97: #{tpu_custom_call.1} parent=0
    _
  %s14 = ssub.s32 1, %s12
  %s15 = scalar_select 0, %s14, %s12
  $region1: #{tpu_custom_call.1} parent=0
    #allocation2 [shape = 'u8[4096]{0}', space=vmem, size = 0x1000, scoped, tag = 'input window, operand 0']
    #allocation3 [shape = 's32[2]{0}', space=sflag, size = 0x8, scoped, tag = 'scoped memory for tpu_custom_call.1']
    #allocation4 [shape = 's32[2]{0}', space=sflag, size = 0x8, scoped, tag = 'scoped memory for tpu_custom_call.1']
    #allocation5 [shape = 'u8[32768]{0}', space=vmem, size = 0x8000, scoped, tag = 'input window, operand 1, single buffered']
    #allocation6 [shape = 's32[1]{0}', space=sflag, size = 0x4, scoped, tag = 'scoped memory for tpu_custom_call.1']
    #allocation7 [shape = 'u8[65536]{0}', space=vmem, size = 0x10000, scoped, tag = 'input window, operand 3, single buffered']
    #allocation8 [shape = 'u8[65536]{0}', space=vmem, size = 0x10000, scoped, tag = 'input window, operand 5, single buffered']
    #allocation9 [shape = 's32[1]{0}', space=sflag, size = 0x4, scoped, tag = 'scoped memory for tpu_custom_call.1']
    #allocation10 [shape = 'u8[32768]{0}', space=vmem, size = 0x8000, scoped, tag = 'input window, operand 9, single buffered']
    #allocation11 [shape = 'u8[8192]{0}', space=vmem, size = 0x2000, scoped, tag = 'output window, operand 0']
    %16 = vsyncpa [#allocation3], 0
    %s17 = scalar_lea.sflag [#allocation3], 1
    %18 = vsyncpa %s17, 0
    %19 = vsyncpa [#allocation6], 0
    %20 = vsyncpa [#allocation9], 0
    %21 = vsyncpa [#allocation4], 0
    %s22 = scalar_lea.sflag [#allocation4], 1
    %23 = vsyncpa %s22, 0
    loop: start=0, step=1, limit=4
    $region2: #{tpu_custom_call.1} parent=1 // loop_pre_header
      _
    $region3: #{tpu_custom_call.1} parent=1 // loop_header
      %s25 = sphi 0, %s29
      %p26 = scmp.ge.s32.totalorder %s25, 4
      %s35 = sphi 0, %s37
      %s38 = sphi 0, %s35
      %s39 = sphi 0, %s38
      %s55 = sphi 0, %s39
      %s59 = sphi 0, %s59
      %s61 = sphi 0, %s59
      %s62 = sphi 0, %s61
      %s76 = sphi 0, %s62
      %s80 = sphi 0, %s80
      %s82 = sphi 0, %s80
      %s83 = sphi 0, %s82
      %s97 = sphi 0, %s83
      %s101 = sphi 0, %s101
      %s103 = sphi 0, %s101
      %s104 = sphi 0, %s103
      %s118 = sphi 0, %s104
      %s122 = sphi 0, %s122
      %s124 = sphi 0, %s122
      %s125 = sphi 0, %s124
      %s139 = sphi 0, %s125
      %s143 = sphi 0, %s143
      %s145 = sphi 0, %s143
      %s146 = sphi 0, %s145
      %s160 = sphi 0, %s146
      %s164 = sphi 0, %s164
      %s166 = sphi 0, %s164
      %s167 = sphi 0, %s166
      %s181 = sphi 0, %s167
      %s185 = sphi 0, %s185
      %s187 = sphi 0, %s185
      %s188 = sphi 0, %s187
      %s202 = sphi 0, %s188
      %s206 = sphi 0, %s206
      %s208 = sphi 0, %s206
      %s209 = sphi 0, %s208
      %s223 = sphi 0, %s209
      %s227 = sphi 0, %s227
      %s229 = sphi 0, %s227
      %s230 = sphi 0, %s229
      %s244 = sphi 0, %s230
      %s248 = sphi 0, %s248
      %s250 = sphi 0, %s248
      %s251 = sphi 0, %s250
      %s265 = sphi 0, %s251
      %s271 = sphi 0, %s273
      %s274 = sphi 0, %s271
      %s275 = sphi 0, %s274
      %s291 = sphi 0, %s275
    $region4: #{tpu_custom_call.1} parent=1 // loop_header_branch
      %28 = sbr.rel (%p26) target = $region8
    $region5: #{tpu_custom_call.1} parent=1 // loop_body
      %s30 = ssub.s32 %s25, 1
      %s31 = ssub.s32 %s25, 2
      %s32 = sadd.s32 %s25, 1
      %s33 = ssub.s32 %s25, %s32
      %p34 = scmp.eq.s32.totalorder %s33, 0
      %s36 = sadd.s32 %s35, 1
      %s37 = scalar_select %p34, %s35, %s36
      %p40 = pneg %p34
      %p41 = scmp.eq.s32.totalorder %s25, 1
      %p42 = por %p40, %p41
      %p43 = scmp.ne.s32.totalorder %s35, %s38
      %p44 = scmp.eq.s32.totalorder %s25, 0
      %p45 = por %p43, %p44
      %p46 = scmp.ne.s32.totalorder %s35, %s38
      %p47 = scmp.eq.s32.totalorder %s30, 1
      %p48 = por %p46, %p47
      %p49 = scmp.ne.s32.totalorder %s38, %s39
      %p50 = scmp.eq.s32.totalorder %s30, 0
      %p51 = por %p49, %p50
      %p52 = scmp.ne.s32.totalorder %s38, %s39
      %p53 = scmp.eq.s32.totalorder %s31, 1
      %p54 = por %p52, %p53
      %p56 = scmp.ne.s32.totalorder %s39, %s55
      %p57 = scmp.eq.s32.totalorder %s31, 0
      %p58 = por %p56, %p57
      %s60 = sadd.s32 %s59, 1
      %p63 = scmp.eq.s32.totalorder %s25, 1
      %p64 = scmp.ne.s32.totalorder %s59, %s61
      %p65 = scmp.eq.s32.totalorder %s25, 0
      %p66 = por %p64, %p65
      %p67 = scmp.ne.s32.totalorder %s59, %s61
      %p68 = scmp.eq.s32.totalorder %s30, 1
      %p69 = por %p67, %p68
      %p70 = scmp.ne.s32.totalorder %s61, %s62
      %p71 = scmp.eq.s32.totalorder %s30, 0
      %p72 = por %p70, %p71
      %p73 = scmp.ne.s32.totalorder %s61, %s62
      %p74 = scmp.eq.s32.totalorder %s31, 1
      %p75 = por %p73, %p74
      %p77 = scmp.ne.s32.totalorder %s62, %s76
      %p78 = scmp.eq.s32.totalorder %s31, 0
      %p79 = por %p77, %p78
      %s81 = sadd.s32 %s80, 1
      %p84 = scmp.eq.s32.totalorder %s25, 1
      %p85 = scmp.ne.s32.totalorder %s80, %s82
      %p86 = scmp.eq.s32.totalorder %s25, 0
      %p87 = por %p85, %p86
      %p88 = scmp.ne.s32.totalorder %s80, %s82
      %p89 = scmp.eq.s32.totalorder %s30, 1
      %p90 = por %p88, %p89
      %p91 = scmp.ne.s32.totalorder %s82, %s83
      %p92 = scmp.eq.s32.totalorder %s30, 0
      %p93 = por %p91, %p92
      %p94 = scmp.ne.s32.totalorder %s82, %s83
      %p95 = scmp.eq.s32.totalorder %s31, 1
      %p96 = por %p94, %p95
      %p98 = scmp.ne.s32.totalorder %s83, %s97
      %p99 = scmp.eq.s32.totalorder %s31, 0
      %p100 = por %p98, %p99
      %s102 = sadd.s32 %s101, 1
      %p105 = scmp.eq.s32.totalorder %s25, 1
      %p106 = scmp.ne.s32.totalorder %s101, %s103
      %p107 = scmp.eq.s32.totalorder %s25, 0
      %p108 = por %p106, %p107
      %p109 = scmp.ne.s32.totalorder %s101, %s103
      %p110 = scmp.eq.s32.totalorder %s30, 1
      %p111 = por %p109, %p110
      %p112 = scmp.ne.s32.totalorder %s103, %s104
      %p113 = scmp.eq.s32.totalorder %s30, 0
      %p114 = por %p112, %p113
      %p115 = scmp.ne.s32.totalorder %s103, %s104
      %p116 = scmp.eq.s32.totalorder %s31, 1
      %p117 = por %p115, %p116
      %p119 = scmp.ne.s32.totalorder %s104, %s118
      %p120 = scmp.eq.s32.totalorder %s31, 0
      %p121 = por %p119, %p120
      %s123 = sadd.s32 %s122, 1
      %p126 = scmp.eq.s32.totalorder %s25, 1
      %p127 = scmp.ne.s32.totalorder %s122, %s124
      %p128 = scmp.eq.s32.totalorder %s25, 0
      %p129 = por %p127, %p128
      %p130 = scmp.ne.s32.totalorder %s122, %s124
      %p131 = scmp.eq.s32.totalorder %s30, 1
      %p132 = por %p130, %p131
      %p133 = scmp.ne.s32.totalorder %s124, %s125
      %p134 = scmp.eq.s32.totalorder %s30, 0
      %p135 = por %p133, %p134
      %p136 = scmp.ne.s32.totalorder %s124, %s125
      %p137 = scmp.eq.s32.totalorder %s31, 1
      %p138 = por %p136, %p137
      %p140 = scmp.ne.s32.totalorder %s125, %s139
      %p141 = scmp.eq.s32.totalorder %s31, 0
      %p142 = por %p140, %p141
      %s144 = sadd.s32 %s143, 1
      %p147 = scmp.eq.s32.totalorder %s25, 1
      %p148 = scmp.ne.s32.totalorder %s143, %s145
      %p149 = scmp.eq.s32.totalorder %s25, 0
      %p150 = por %p148, %p149
      %p151 = scmp.ne.s32.totalorder %s143, %s145
      %p152 = scmp.eq.s32.totalorder %s30, 1
      %p153 = por %p151, %p152
      %p154 = scmp.ne.s32.totalorder %s145, %s146
      %p155 = scmp.eq.s32.totalorder %s30, 0
      %p156 = por %p154, %p155
      %p157 = scmp.ne.s32.totalorder %s145, %s146
      %p158 = scmp.eq.s32.totalorder %s31, 1
      %p159 = por %p157, %p158
      %p161 = scmp.ne.s32.totalorder %s146, %s160
      %p162 = scmp.eq.s32.totalorder %s31, 0
      %p163 = por %p161, %p162
      %s165 = sadd.s32 %s164, 1
      %p168 = scmp.eq.s32.totalorder %s25, 1
      %p169 = scmp.ne.s32.totalorder %s164, %s166
      %p170 = scmp.eq.s32.totalorder %s25, 0
      %p171 = por %p169, %p170
      %p172 = scmp.ne.s32.totalorder %s164, %s166
      %p173 = scmp.eq.s32.totalorder %s30, 1
      %p174 = por %p172, %p173
      %p175 = scmp.ne.s32.totalorder %s166, %s167
      %p176 = scmp.eq.s32.totalorder %s30, 0
      %p177 = por %p175, %p176
      %p178 = scmp.ne.s32.totalorder %s166, %s167
      %p179 = scmp.eq.s32.totalorder %s31, 1
      %p180 = por %p178, %p179
      %p182 = scmp.ne.s32.totalorder %s167, %s181
      %p183 = scmp.eq.s32.totalorder %s31, 0
      %p184 = por %p182, %p183
      %s186 = sadd.s32 %s185, 1
      %p189 = scmp.eq.s32.totalorder %s25, 1
      %p190 = scmp.ne.s32.totalorder %s185, %s187
      %p191 = scmp.eq.s32.totalorder %s25, 0
      %p192 = por %p190, %p191
      %p193 = scmp.ne.s32.totalorder %s185, %s187
      %p194 = scmp.eq.s32.totalorder %s30, 1
      %p195 = por %p193, %p194
      %p196 = scmp.ne.s32.totalorder %s187, %s188
      %p197 = scmp.eq.s32.totalorder %s30, 0
      %p198 = por %p196, %p197
      %p199 = scmp.ne.s32.totalorder %s187, %s188
      %p200 = scmp.eq.s32.totalorder %s31, 1
      %p201 = por %p199, %p200
      %p203 = scmp.ne.s32.totalorder %s188, %s202
      %p204 = scmp.eq.s32.totalorder %s31, 0
      %p205 = por %p203, %p204
      %s207 = sadd.s32 %s206, 1
      %p210 = scmp.eq.s32.totalorder %s25, 1
      %p211 = scmp.ne.s32.totalorder %s206, %s208
      %p212 = scmp.eq.s32.totalorder %s25, 0
      %p213 = por %p211, %p212
      %p214 = scmp.ne.s32.totalorder %s206, %s208
      %p215 = scmp.eq.s32.totalorder %s30, 1
      %p216 = por %p214, %p215
      %p217 = scmp.ne.s32.totalorder %s208, %s209
      %p218 = scmp.eq.s32.totalorder %s30, 0
      %p219 = por %p217, %p218
      %p220 = scmp.ne.s32.totalorder %s208, %s209
      %p221 = scmp.eq.s32.totalorder %s31, 1
      %p222 = por %p220, %p221
      %p224 = scmp.ne.s32.totalorder %s209, %s223
      %p225 = scmp.eq.s32.totalorder %s31, 0
      %p226 = por %p224, %p225
      %s228 = sadd.s32 %s227, 1
      %p231 = scmp.eq.s32.totalorder %s25, 1
      %p232 = scmp.ne.s32.totalorder %s227, %s229
      %p233 = scmp.eq.s32.totalorder %s25, 0
      %p234 = por %p232, %p233
      %p235 = scmp.ne.s32.totalorder %s227, %s229
      %p236 = scmp.eq.s32.totalorder %s30, 1
      %p237 = por %p235, %p236
      %p238 = scmp.ne.s32.totalorder %s229, %s230
      %p239 = scmp.eq.s32.totalorder %s30, 0
      %p240 = por %p238, %p239
      %p241 = scmp.ne.s32.totalorder %s229, %s230
      %p242 = scmp.eq.s32.totalorder %s31, 1
      %p243 = por %p241, %p242
      %p245 = scmp.ne.s32.totalorder %s230, %s244
      %p246 = scmp.eq.s32.totalorder %s31, 0
      %p247 = por %p245, %p246
      %s249 = sadd.s32 %s248, 1
      %p252 = scmp.eq.s32.totalorder %s25, 1
      %p253 = scmp.ne.s32.totalorder %s248, %s250
      %p254 = scmp.eq.s32.totalorder %s25, 0
      %p255 = por %p253, %p254
      %p256 = scmp.ne.s32.totalorder %s248, %s250
      %p257 = scmp.eq.s32.totalorder %s30, 1
      %p258 = por %p256, %p257
      %p259 = scmp.ne.s32.totalorder %s250, %s251
      %p260 = scmp.eq.s32.totalorder %s30, 0
      %p261 = por %p259, %p260
      %p262 = scmp.ne.s32.totalorder %s250, %s251
      %p263 = scmp.eq.s32.totalorder %s31, 1
      %p264 = por %p262, %p263
      %p266 = scmp.ne.s32.totalorder %s251, %s265
      %p267 = scmp.eq.s32.totalorder %s31, 0
      %p268 = por %p266, %p267
      %s269 = ssub.s32 %s25, %s32
      %p270 = scmp.eq.s32.totalorder %s269, 0
      %s272 = sadd.s32 %s271, 1
      %s273 = scalar_select %p270, %s271, %s272
      %p276 = pneg %p270
      %p277 = scmp.eq.s32.totalorder %s25, 1
      %p278 = por %p276, %p277
      %p279 = scmp.ne.s32.totalorder %s271, %s274
      %p280 = scmp.eq.s32.totalorder %s25, 0
      %p281 = por %p279, %p280
      %p282 = scmp.ne.s32.totalorder %s271, %s274
      %p283 = scmp.eq.s32.totalorder %s30, 1
      %p284 = por %p282, %p283
      %p285 = scmp.ne.s32.totalorder %s274, %s275
      %p286 = scmp.eq.s32.totalorder %s30, 0
      %p287 = por %p285, %p286
      %p288 = scmp.ne.s32.totalorder %s274, %s275
      %p289 = scmp.eq.s32.totalorder %s31, 1
      %p290 = por %p288, %p289
      %p292 = scmp.ne.s32.totalorder %s275, %s291
      %p293 = scmp.eq.s32.totalorder %s31, 0
      %p294 = por %p292, %p293
      %p295 = scmp.le.s32.totalorder 1, %s25
      %p296 = scmp.lt.s32.totalorder %s25, 3
      %p297 = pnand %p295, %p296
      %p298 = pneg %p297
      // Predicated region
      $region9: #{tpu_custom_call.1} parent=5 // pred_check
        _
      $region10: #{tpu_custom_call.1} parent=5 // pred_check_branch
        %300 = sbr.rel (%p297) target = $region12
      $region11: #{tpu_custom_call.1} parent=5 // pred_region
        %s301 = ssub.s32 %s25, 1
        // Predicated region
        $region13: #{tpu_custom_call.1} parent=11 // pred_check
          %p302 = pneg %p72
        $region14: #{tpu_custom_call.1} parent=11 // pred_check_branch
          %304 = sbr.rel (%p302) target = $region16
        $region15: #{tpu_custom_call.1} parent=11 // pred_region
          %s306 = ssub.s32 1024, 1024
          %307 = vsyncadd [#allocation6], %s306
          %s308 = sshll.u32 [#allocation5], 4
          %s309 = int_to_ptr.vmem [resolvable:$true] %s308
          %314 = dma.hbm_to_vmem [thread:$0]  %s1, 1024, %s309, [#allocation6], 64, 64, 4
        $region16: #{tpu_custom_call.1} parent=11 // pred_fallthru
          _
        // Predicated region
        $region17: #{tpu_custom_call.1} parent=11 // pred_check
          %p315 = pneg %p93
        $region18: #{tpu_custom_call.1} parent=11 // pred_check_branch
          %317 = sbr.rel (%p315) target = $region20
        $region19: #{tpu_custom_call.1} parent=11 // pred_region
          _
        $region20: #{tpu_custom_call.1} parent=11 // pred_fallthru
          _
        // Predicated region
        $region21: #{tpu_custom_call.1} parent=11 // pred_check
          %p318 = pneg %p114
        $region22: #{tpu_custom_call.1} parent=11 // pred_check_branch
          %320 = sbr.rel (%p318) target = $region24
        $region23: #{tpu_custom_call.1} parent=11 // pred_region
          %s322 = ssub.s32 2048, 2048
          %323 = vsyncadd [#allocation6], %s322
          %s324 = sshll.u32 [#allocation7], 4
          %s325 = int_to_ptr.vmem [resolvable:$true] %s324
          %330 = dma.hbm_to_vmem [thread:$0]  %s3, 2048, %s325, [#allocation6], 64, 64, 4
        $region24: #{tpu_custom_call.1} parent=11 // pred_fallthru
          _
        // Predicated region
        $region25: #{tpu_custom_call.1} parent=11 // pred_check
          %p331 = pneg %p135
        $region26: #{tpu_custom_call.1} parent=11 // pred_check_branch
          %333 = sbr.rel (%p331) target = $region28
        $region27: #{tpu_custom_call.1} parent=11 // pred_region
          _
        $region28: #{tpu_custom_call.1} parent=11 // pred_fallthru
          _
        // Predicated region
        $region29: #{tpu_custom_call.1} parent=11 // pred_check
          %p334 = pneg %p156
        $region30: #{tpu_custom_call.1} parent=11 // pred_check_branch
          %336 = sbr.rel (%p334) target = $region32
        $region31: #{tpu_custom_call.1} parent=11 // pred_region
          %s338 = ssub.s32 2048, 2048
          %339 = vsyncadd [#allocation9], %s338
          %s340 = sshll.u32 [#allocation8], 4
          %s341 = int_to_ptr.vmem [resolvable:$true] %s340
          %346 = dma.hbm_to_vmem [thread:$0]  %s5, 2048, %s341, [#allocation9], 64, 64, 4
        $region32: #{tpu_custom_call.1} parent=11 // pred_fallthru
          _
        // Predicated region
        $region33: #{tpu_custom_call.1} parent=11 // pred_check
          %p347 = pneg %p177
        $region34: #{tpu_custom_call.1} parent=11 // pred_check_branch
          %349 = sbr.rel (%p347) target = $region36
        $region35: #{tpu_custom_call.1} parent=11 // pred_region
          _
        $region36: #{tpu_custom_call.1} parent=11 // pred_fallthru
          _
        // Predicated region
        $region37: #{tpu_custom_call.1} parent=11 // pred_check
          %p350 = pneg %p198
        $region38: #{tpu_custom_call.1} parent=11 // pred_check_branch
          %352 = sbr.rel (%p350) target = $region40
        $region39: #{tpu_custom_call.1} parent=11 // pred_region
          _
        $region40: #{tpu_custom_call.1} parent=11 // pred_fallthru
          _
        // Predicated region
        $region41: #{tpu_custom_call.1} parent=11 // pred_check
          %p353 = pneg %p219
        $region42: #{tpu_custom_call.1} parent=11 // pred_check_branch
          %355 = sbr.rel (%p353) target = $region44
        $region43: #{tpu_custom_call.1} parent=11 // pred_region
          _
        $region44: #{tpu_custom_call.1} parent=11 // pred_fallthru
          _
        // Predicated region
        $region45: #{tpu_custom_call.1} parent=11 // pred_check
          %p356 = pneg %p240
        $region46: #{tpu_custom_call.1} parent=11 // pred_check_branch
          %358 = sbr.rel (%p356) target = $region48
        $region47: #{tpu_custom_call.1} parent=11 // pred_region
          %s360 = ssub.s32 1024, 1024
          %361 = vsyncadd [#allocation9], %s360
          %s362 = sshll.u32 [#allocation10], 4
          %s363 = int_to_ptr.vmem [resolvable:$true] %s362
          %368 = dma.hbm_to_vmem [thread:$0]  %s9, 1024, %s363, [#allocation9], 64, 64, 4
        $region48: #{tpu_custom_call.1} parent=11 // pred_fallthru
          _
        // Predicated region
        $region49: #{tpu_custom_call.1} parent=11 // pred_check
          %p369 = pneg %p261
        $region50: #{tpu_custom_call.1} parent=11 // pred_check_branch
          %371 = sbr.rel (%p369) target = $region52
        $region51: #{tpu_custom_call.1} parent=11 // pred_region
          _
        $region52: #{tpu_custom_call.1} parent=11 // pred_fallthru
          _
      $region12: #{tpu_custom_call.1} parent=5 // pred_fallthru
        _
      %p372 = scmp.lt.s32.totalorder %s25, 2
      // Predicated region
      $region53: #{tpu_custom_call.1} parent=5 // pred_check
        %p373 = pneg %p372
      $region54: #{tpu_custom_call.1} parent=5 // pred_check_branch
        %375 = sbr.rel (%p373) target = $region56
      $region55: #{tpu_custom_call.1} parent=5 // pred_region
        // Predicated region
        $region57: #{tpu_custom_call.1} parent=55 // pred_check
          %p376 = pneg %p45
        $region58: #{tpu_custom_call.1} parent=55 // pred_check_branch
          %378 = sbr.rel (%p376) target = $region60
        $region59: #{tpu_custom_call.1} parent=55 // pred_region
          %s379 = sand.u32 %s35, 1
          %s380 = scalar_lea.sflag [#allocation3], %s379
          %s381 = sand.u32 %s35, 1
          %s382 = smul.addr %s381, 4
          %s383 = scalar_lea.vmem [#allocation2], %s382
          %s385 = ssub.s32 64, 64
          %386 = vsyncadd %s380, %s385
          %s387 = smul.addr %s25, 64
          %s388 = scalar_lea.hbm %s0, %s387
          %s390 = sshll.u32 %s383, 4
          %s391 = int_to_ptr.vmem [resolvable:$true] %s390
          %393 = dma.hbm_to_vmem [thread:$0]  %s388, 64, %s391, %s380
        $region60: #{tpu_custom_call.1} parent=55 // pred_fallthru
          _
      $region56: #{tpu_custom_call.1} parent=5 // pred_fallthru
        _
      %p394 = scmp.le.s32.totalorder 1, %s25
      %p395 = scmp.lt.s32.totalorder %s25, 3
      %p396 = pnand %p394, %p395
      %p397 = pneg %p396
      // Predicated region
      $region61: #{tpu_custom_call.1} parent=5 // pred_check
        _
      $region62: #{tpu_custom_call.1} parent=5 // pred_check_branch
        %399 = sbr.rel (%p396) target = $region64
      $region63: #{tpu_custom_call.1} parent=5 // pred_region
        %s400 = ssub.s32 %s25, 1
        %s401 = sand.u32 %s38, 1
        %s402 = scalar_lea.sflag [#allocation3], %s401
        %s403 = sand.u32 %s38, 1
        %s404 = smul.addr %s403, 4
        %s405 = scalar_lea.vmem [#allocation2], %s404
        // Predicated region
        $region65: #{tpu_custom_call.1} parent=63 // pred_check
          %p406 = pneg %p51
        $region66: #{tpu_custom_call.1} parent=63 // pred_check_branch
          %408 = sbr.rel (%p406) target = $region68
        $region67: #{tpu_custom_call.1} parent=63 // pred_region
          %409 = dma.done %s402, 64
        $region68: #{tpu_custom_call.1} parent=63 // pred_fallthru
          _
        // Predicated region
        $region69: #{tpu_custom_call.1} parent=63 // pred_check
          %p410 = pneg %p72
        $region70: #{tpu_custom_call.1} parent=63 // pred_check_branch
          %412 = sbr.rel (%p410) target = $region72
        $region71: #{tpu_custom_call.1} parent=63 // pred_region
          %413 = dma.done [#allocation6], 1024
        $region72: #{tpu_custom_call.1} parent=63 // pred_fallthru
          _
        // Predicated region
        $region73: #{tpu_custom_call.1} parent=63 // pred_check
          %p414 = pneg %p114
        $region74: #{tpu_custom_call.1} parent=63 // pred_check_branch
          %416 = sbr.rel (%p414) target = $region76
        $region75: #{tpu_custom_call.1} parent=63 // pred_region
          %417 = dma.done [#allocation6], 2048
        $region76: #{tpu_custom_call.1} parent=63 // pred_fallthru
          _
        // Predicated region
        $region77: #{tpu_custom_call.1} parent=63 // pred_check
          %p418 = pneg %p156
        $region78: #{tpu_custom_call.1} parent=63 // pred_check_branch
          %420 = sbr.rel (%p418) target = $region80
        $region79: #{tpu_custom_call.1} parent=63 // pred_region
          %421 = dma.done [#allocation9], 2048
        $region80: #{tpu_custom_call.1} parent=63 // pred_fallthru
          _
        // Predicated region
        $region81: #{tpu_custom_call.1} parent=63 // pred_check
          %p422 = pneg %p240
        $region82: #{tpu_custom_call.1} parent=63 // pred_check_branch
          %424 = sbr.rel (%p422) target = $region84
        $region83: #{tpu_custom_call.1} parent=63 // pred_region
          %425 = dma.done [#allocation9], 1024
        $region84: #{tpu_custom_call.1} parent=63 // pred_fallthru
          _
        %s426 = sand.u32 %s38, 1
        %s427 = scalar_lea.sflag [#allocation3], %s426
        %s428 = sand.u32 %s38, 1
        %s429 = smul.addr %s428, 4
        %s430 = scalar_lea.vmem [#allocation2], %s429
        %p431 = pneg %p51
        %p432 = pneg %p48
        %p433 = pneg %p72
        %p434 = pneg %p69
        %p435 = pneg %p93
        %p436 = pneg %p90
        %p437 = pneg %p114
        %p438 = pneg %p111
        %p439 = pneg %p135
        %p440 = pneg %p132
        %p441 = pneg %p156
        %p442 = pneg %p153
        %p443 = pneg %p177
        %p444 = pneg %p174
        %p445 = pneg %p198
        %p446 = pneg %p195
        %p447 = pneg %p219
        %p448 = pneg %p216
        %p449 = pneg %p240
        %p450 = pneg %p237
        %p451 = pneg %p261
        %p452 = pneg %p258
        %p453 = pneg %p287
        %p454 = pneg %p284
        %s455 = sand.u32 %s274, 1
        %s456 = scalar_lea.sflag [#allocation4], %s455
        %s457 = sand.u32 %s274, 1
        %s458 = smul.addr %s457, 8
        %s459 = scalar_lea.vmem [#allocation11], %s458
        %v461 = vld [vmem:[%s405] sm:$0xf]
        %v462 = vld [vmem:[#allocation5] sm:$0xf]
        %v463 = vld [vmem:[#allocation5 + $0x4] sm:$0xf]
        %v464 = vld [vmem:[#allocation5 + $0x8] sm:$0xf]
        %v465 = vld [vmem:[#allocation5 + $0xc] sm:$0xf]
        %v466 = vld [vmem:[#allocation5 + $0x10] sm:$0xf]
        %v467 = vld [vmem:[#allocation5 + $0x14] sm:$0xf]
        %v468 = vld [vmem:[#allocation5 + $0x18] sm:$0xf]
        %v469 = vld [vmem:[#allocation5 + $0x1c] sm:$0xf]
        %v470 = vld [vmem:[#allocation5 + $0x20] sm:$0xf]
        %v471 = vld [vmem:[#allocation5 + $0x24] sm:$0xf]
        %v472 = vld [vmem:[#allocation5 + $0x28] sm:$0xf]
        %v473 = vld [vmem:[#allocation5 + $0x2c] sm:$0xf]
        %v474 = vld [vmem:[#allocation5 + $0x30] sm:$0xf]
        %v475 = vld [vmem:[#allocation5 + $0x34] sm:$0xf]
        %v476 = vld [vmem:[#allocation5 + $0x38] sm:$0xf]
        %v477 = vld [vmem:[#allocation5 + $0x3c] sm:$0xf]
        %v478 = vld [vmem:[%s2] sm:$0x1]
        %v480 = vlaneseq
        %v481 = vshrl.u32 %v480, 7
        %v482 = vsub.s32 0, %v481
        %v483 = vrot.slane %v478, %v482
        %v501 = vunpack.c.l.b16 %v462
        %v502 = vunpack.c.l.b16 %v463
        %v503 = vunpack.c.l.b16 %v464
        %v504 = vunpack.c.l.b16 %v465
        %v505 = vunpack.c.l.b16 %v466
        %v506 = vunpack.c.l.b16 %v467
        %v507 = vunpack.c.l.b16 %v468
        %v508 = vunpack.c.l.b16 %v469
        %v509 = vunpack.c.l.b16 %v470
        %v510 = vunpack.c.l.b16 %v471
        %v511 = vunpack.c.l.b16 %v472
        %v512 = vunpack.c.l.b16 %v473
        %v513 = vunpack.c.l.b16 %v474
        %v514 = vunpack.c.l.b16 %v475
        %v515 = vunpack.c.l.b16 %v476
        %v516 = vunpack.c.l.b16 %v477
        %v517 = vpack.c.b16 %v502, %v501
        %v518 = vpack.c.b16 %v504, %v503
        %v519 = vpack.c.b16 %v506, %v505
        %v520 = vpack.c.b16 %v508, %v507
        %v521 = vpack.c.b16 %v510, %v509
        %v522 = vpack.c.b16 %v512, %v511
        %v523 = vpack.c.b16 %v514, %v513
        %v524 = vpack.c.b16 %v516, %v515
        %533 = vmatprep.subr.bf16.mxu0 0
        %534 = vmatpush1.bf16.msra.mxu0 %v517
        %535 = vmatprep.subr.bf16.mxu0 0
        %536 = vmatpush1.bf16.msra.mxu0 %v518
        %537 = vmatprep.subr.bf16.mxu0 0
        %538 = vmatpush1.bf16.msra.mxu0 %v519
        %539 = vmatprep.subr.bf16.mxu0 0
        %540 = vmatpush1.bf16.msra.mxu0 %v520
        %541 = vmatprep.subr.bf16.mxu0 0
        %542 = vmatpush1.bf16.msra.mxu0 %v521
        %543 = vmatprep.subr.bf16.mxu0 0
        %544 = vmatpush1.bf16.msra.mxu0 %v522
        %545 = vmatprep.subr.bf16.mxu0 0
        %546 = vmatpush1.bf16.msra.mxu0 %v523
        %547 = vmatprep.subr.bf16.mxu0 0
        %548 = vmatpush1.bf16.msra.mxu0 %v524
        %549 = vmatprep.subr.bf16.mxu0 0
        %550 = vmatpush1.bf16.msra.mxu0 0
        %551 = vmatprep.subr.bf16.mxu0 0
        %552 = vmatpush1.bf16.msra.mxu0 0
        %553 = vmatprep.subr.bf16.mxu0 0
        %554 = vmatpush1.bf16.msra.mxu0 0
        %555 = vmatprep.subr.bf16.mxu0 0
        %556 = vmatpush1.bf16.msra.mxu0 0
        %557 = vmatprep.subr.bf16.mxu0 0
        %558 = vmatpush1.bf16.msra.mxu0 0
        %559 = vmatprep.subr.bf16.mxu0 0
        %560 = vmatpush1.bf16.msra.mxu0 0
        %561 = vmatprep.subr.bf16.mxu0 0
        %562 = vmatpush1.bf16.msra.mxu0 0
        %563 = vmatprep.subr.bf16.mxu0 0
        %564 = vmatpush1.bf16.msra.mxu0 0
        %565 = vmatprep.mubr.bf16.mxu0 0
        %566 = vmatmul.mubr.bf16.gmra.mrb[0].mxu0 %v461
        %v567 = vpop.f32.mrb[0].mxu0
        %v568 = vadd.f32 %v483, %v567
        %v569 = vpop.f32.mrb[0].mxu0
        %v570 = vpop.f32.mrb[0].mxu0
        %v571 = vpop.f32.mrb[0].mxu0
        %572 = vdwg.mxu0
        %v573 = vpack.c.bf16 %v568, %v568
        %v574 = vld [vmem:[#allocation7] sm:$0xf]
        %v575 = vld [vmem:[#allocation7 + $0x4] sm:$0xf]
        %v576 = vld [vmem:[#allocation7 + $0x8] sm:$0xf]
        %v577 = vld [vmem:[#allocation7 + $0xc] sm:$0xf]
        %v578 = vld [vmem:[#allocation7 + $0x10] sm:$0xf]
        %v579 = vld [vmem:[#allocation7 + $0x14] sm:$0xf]
        %v580 = vld [vmem:[#allocation7 + $0x18] sm:$0xf]
        %v581 = vld [vmem:[#allocation7 + $0x1c] sm:$0xf]
        %v582 = vld [vmem:[#allocation7 + $0x20] sm:$0xf]
        %v583 = vld [vmem:[#allocation7 + $0x24] sm:$0xf]
        %v584 = vld [vmem:[#allocation7 + $0x28] sm:$0xf]
        %v585 = vld [vmem:[#allocation7 + $0x2c] sm:$0xf]
        %v586 = vld [vmem:[#allocation7 + $0x30] sm:$0xf]
        %v587 = vld [vmem:[#allocation7 + $0x34] sm:$0xf]
        %v588 = vld [vmem:[#allocation7 + $0x38] sm:$0xf]
        %v589 = vld [vmem:[#allocation7 + $0x3c] sm:$0xf]
        %v590 = vld [vmem:[%s4] sm:$0x1]
        %v592 = vlaneseq
        %v593 = vshrl.u32 %v592, 7
        %v594 = vsub.s32 0, %v593
        %v595 = vrot.slane %v590, %v594
        %v613 = vunpack.c.l.b16 %v574
        %v614 = vunpack.c.l.b16 %v575
        %v615 = vunpack.c.l.b16 %v576
        %v616 = vunpack.c.l.b16 %v577
        %v617 = vunpack.c.l.b16 %v578
        %v618 = vunpack.c.l.b16 %v579
        %v619 = vunpack.c.l.b16 %v580
        %v620 = vunpack.c.l.b16 %v581
        %v621 = vunpack.c.l.b16 %v582
        %v622 = vunpack.c.l.b16 %v583
        %v623 = vunpack.c.l.b16 %v584
        %v624 = vunpack.c.l.b16 %v585
        %v625 = vunpack.c.l.b16 %v586
        %v626 = vunpack.c.l.b16 %v587
        %v627 = vunpack.c.l.b16 %v588
        %v628 = vunpack.c.l.b16 %v589
        %v629 = vpack.c.b16 %v614, %v613
        %v630 = vpack.c.b16 %v616, %v615
        %v631 = vpack.c.b16 %v618, %v617
        %v632 = vpack.c.b16 %v620, %v619
        %v633 = vpack.c.b16 %v622, %v621
        %v634 = vpack.c.b16 %v624, %v623
        %v635 = vpack.c.b16 %v626, %v625
        %v636 = vpack.c.b16 %v628, %v627
        %645 = vmatprep.subr.bf16.mxu0 0
        %646 = vmatpush1.bf16.msra.mxu0 %v629
        %647 = vmatprep.subr.bf16.mxu0 0
        %648 = vmatpush1.bf16.msra.mxu0 %v630
        %649 = vmatprep.subr.bf16.mxu0 0
        %650 = vmatpush1.bf16.msra.mxu0 %v631
        %651 = vmatprep.subr.bf16.mxu0 0
        %652 = vmatpush1.bf16.msra.mxu0 %v632
        %653 = vmatprep.subr.bf16.mxu0 0
        %654 = vmatpush1.bf16.msra.mxu0 %v633
        %655 = vmatprep.subr.bf16.mxu0 0
        %656 = vmatpush1.bf16.msra.mxu0 %v634
        %657 = vmatprep.subr.bf16.mxu0 0
        %658 = vmatpush1.bf16.msra.mxu0 %v635
        %659 = vmatprep.subr.bf16.mxu0 0
        %660 = vmatpush1.bf16.msra.mxu0 %v636
        %661 = vmatprep.subr.bf16.mxu0 0
        %662 = vmatpush1.bf16.msra.mxu0 0
        %663 = vmatprep.subr.bf16.mxu0 0
        %664 = vmatpush1.bf16.msra.mxu0 0
        %665 = vmatprep.subr.bf16.mxu0 0
        %666 = vmatpush1.bf16.msra.mxu0 0
        %667 = vmatprep.subr.bf16.mxu0 0
        %668 = vmatpush1.bf16.msra.mxu0 0
        %669 = vmatprep.subr.bf16.mxu0 0
        %670 = vmatpush1.bf16.msra.mxu0 0
        %671 = vmatprep.subr.bf16.mxu0 0
        %672 = vmatpush1.bf16.msra.mxu0 0
        %673 = vmatprep.subr.bf16.mxu0 0
        %674 = vmatpush1.bf16.msra.mxu0 0
        %675 = vmatprep.subr.bf16.mxu0 0
        %676 = vmatpush1.bf16.msra.mxu0 0
        %677 = vmatprep.mubr.bf16.mxu0 0
        %678 = vmatmul.mubr.bf16.gmra.mrb[0].mxu0 %v573
        %v679 = vpop.f32.mrb[0].mxu0
        %v680 = vadd.f32 %v595, %v679
        %v681 = vpop.f32.mrb[0].mxu0
        %v682 = vpop.f32.mrb[0].mxu0
        %v683 = vpop.f32.mrb[0].mxu0
        %684 = vdwg.mxu0
        %v685 = vmax.f32 %v680, 0.0
        %v686 = vpack.c.bf16 %v685, %v685
        %v687 = vld [vmem:[#allocation8] sm:$0xf]
        %v688 = vld [vmem:[#allocation8 + $0x4] sm:$0xf]
        %v689 = vld [vmem:[#allocation8 + $0x8] sm:$0xf]
        %v690 = vld [vmem:[#allocation8 + $0xc] sm:$0xf]
        %v691 = vld [vmem:[#allocation8 + $0x10] sm:$0xf]
        %v692 = vld [vmem:[#allocation8 + $0x14] sm:$0xf]
        %v693 = vld [vmem:[#allocation8 + $0x18] sm:$0xf]
        %v694 = vld [vmem:[#allocation8 + $0x1c] sm:$0xf]
        %v695 = vld [vmem:[#allocation8 + $0x20] sm:$0xf]
        %v696 = vld [vmem:[#allocation8 + $0x24] sm:$0xf]
        %v697 = vld [vmem:[#allocation8 + $0x28] sm:$0xf]
        %v698 = vld [vmem:[#allocation8 + $0x2c] sm:$0xf]
        %v699 = vld [vmem:[#allocation8 + $0x30] sm:$0xf]
        %v700 = vld [vmem:[#allocation8 + $0x34] sm:$0xf]
        %v701 = vld [vmem:[#allocation8 + $0x38] sm:$0xf]
        %v702 = vld [vmem:[#allocation8 + $0x3c] sm:$0xf]
        %v719 = vunpack.c.l.b16 %v687
        %v720 = vunpack.c.l.b16 %v688
        %v721 = vunpack.c.l.b16 %v689
        %v722 = vunpack.c.l.b16 %v690
        %v723 = vunpack.c.l.b16 %v691
        %v724 = vunpack.c.l.b16 %v692
        %v725 = vunpack.c.l.b16 %v693
        %v726 = vunpack.c.l.b16 %v694
        %v727 = vunpack.c.l.b16 %v695
        %v728 = vunpack.c.l.b16 %v696
        %v729 = vunpack.c.l.b16 %v697
        %v730 = vunpack.c.l.b16 %v698
        %v731 = vunpack.c.l.b16 %v699
        %v732 = vunpack.c.l.b16 %v700
        %v733 = vunpack.c.l.b16 %v701
        %v734 = vunpack.c.l.b16 %v702
        %v735 = vpack.c.b16 %v720, %v719
        %v736 = vpack.c.b16 %v722, %v721
        %v737 = vpack.c.b16 %v724, %v723
        %v738 = vpack.c.b16 %v726, %v725
        %v739 = vpack.c.b16 %v728, %v727
        %v740 = vpack.c.b16 %v730, %v729
        %v741 = vpack.c.b16 %v732, %v731
        %v742 = vpack.c.b16 %v734, %v733
        %751 = vmatprep.subr.bf16.mxu0 0
        %752 = vmatpush1.bf16.msra.mxu0 %v735
        %753 = vmatprep.subr.bf16.mxu0 0
        %754 = vmatpush1.bf16.msra.mxu0 %v736
        %755 = vmatprep.subr.bf16.mxu0 0
        %756 = vmatpush1.bf16.msra.mxu0 %v737
        %757 = vmatprep.subr.bf16.mxu0 0
        %758 = vmatpush1.bf16.msra.mxu0 %v738
        %759 = vmatprep.subr.bf16.mxu0 0
        %760 = vmatpush1.bf16.msra.mxu0 %v739
        %761 = vmatprep.subr.bf16.mxu0 0
        %762 = vmatpush1.bf16.msra.mxu0 %v740
        %763 = vmatprep.subr.bf16.mxu0 0
        %764 = vmatpush1.bf16.msra.mxu0 %v741
        %765 = vmatprep.subr.bf16.mxu0 0
        %766 = vmatpush1.bf16.msra.mxu0 %v742
        %767 = vmatprep.subr.bf16.mxu0 0
        %768 = vmatpush1.bf16.msra.mxu0 0
        %769 = vmatprep.subr.bf16.mxu0 0
        %770 = vmatpush1.bf16.msra.mxu0 0
        %771 = vmatprep.subr.bf16.mxu0 0
        %772 = vmatpush1.bf16.msra.mxu0 0
        %773 = vmatprep.subr.bf16.mxu0 0
        %774 = vmatpush1.bf16.msra.mxu0 0
        %775 = vmatprep.subr.bf16.mxu0 0
        %776 = vmatpush1.bf16.msra.mxu0 0
        %777 = vmatprep.subr.bf16.mxu0 0
        %778 = vmatpush1.bf16.msra.mxu0 0
        %779 = vmatprep.subr.bf16.mxu0 0
        %780 = vmatpush1.bf16.msra.mxu0 0
        %781 = vmatprep.subr.bf16.mxu0 0
        %782 = vmatpush1.bf16.msra.mxu0 0
        %783 = vmatprep.mubr.bf16.mxu0 0
        %784 = vmatmul.mubr.bf16.gmra.mrb[0].mxu0 %v686
        %v785 = vpop.f32.mrb[0].mxu0
        %v786 = vadd.f32 0.0, %v785
        %v787 = vpop.f32.mrb[0].mxu0
        %v788 = vpop.f32.mrb[0].mxu0
        %v789 = vpop.f32.mrb[0].mxu0
        %790 = vdwg.mxu0
        %v791 = vadd.f32 %v568, %v786
        %v792 = vld [vmem:[%s6] sm:$0x1]
        %v794 = vlaneseq
        %v795 = vshrl.u32 %v794, 7
        %v796 = vsub.s32 0, %v795
        %v797 = vrot.slane %v792, %v796
        %v799 = vadd.f32 %v791, %v797
        %v800 = vpack.c.bf16 %v799, %v799
        %s801 = scalar_lea.vmem [#allocation7], 64
        %v802 = vld [vmem:[%s801] sm:$0xf]
        %v803 = vld [vmem:[%s801 + $0x4] sm:$0xf]
        %v804 = vld [vmem:[%s801 + $0x8] sm:$0xf]
        %v805 = vld [vmem:[%s801 + $0xc] sm:$0xf]
        %v806 = vld [vmem:[%s801 + $0x10] sm:$0xf]
        %v807 = vld [vmem:[%s801 + $0x14] sm:$0xf]
        %v808 = vld [vmem:[%s801 + $0x18] sm:$0xf]
        %v809 = vld [vmem:[%s801 + $0x1c] sm:$0xf]
        %v810 = vld [vmem:[%s801 + $0x20] sm:$0xf]
        %v811 = vld [vmem:[%s801 + $0x24] sm:$0xf]
        %v812 = vld [vmem:[%s801 + $0x28] sm:$0xf]
        %v813 = vld [vmem:[%s801 + $0x2c] sm:$0xf]
        %v814 = vld [vmem:[%s801 + $0x30] sm:$0xf]
        %v815 = vld [vmem:[%s801 + $0x34] sm:$0xf]
        %v816 = vld [vmem:[%s801 + $0x38] sm:$0xf]
        %v817 = vld [vmem:[%s801 + $0x3c] sm:$0xf]
        %s818 = scalar_lea.vmem %s4, 1
        %v819 = vld [vmem:[%s818] sm:$0x1]
        %v821 = vlaneseq
        %v822 = vshrl.u32 %v821, 7
        %v823 = vsub.s32 0, %v822
        %v824 = vrot.slane %v819, %v823
        %v842 = vunpack.c.l.b16 %v802
        %v843 = vunpack.c.l.b16 %v803
        %v844 = vunpack.c.l.b16 %v804
        %v845 = vunpack.c.l.b16 %v805
        %v846 = vunpack.c.l.b16 %v806
        %v847 = vunpack.c.l.b16 %v807
        %v848 = vunpack.c.l.b16 %v808
        %v849 = vunpack.c.l.b16 %v809
        %v850 = vunpack.c.l.b16 %v810
        %v851 = vunpack.c.l.b16 %v811
        %v852 = vunpack.c.l.b16 %v812
        %v853 = vunpack.c.l.b16 %v813
        %v854 = vunpack.c.l.b16 %v814
        %v855 = vunpack.c.l.b16 %v815
        %v856 = vunpack.c.l.b16 %v816
        %v857 = vunpack.c.l.b16 %v817
        %v858 = vpack.c.b16 %v843, %v842
        %v859 = vpack.c.b16 %v845, %v844
        %v860 = vpack.c.b16 %v847, %v846
        %v861 = vpack.c.b16 %v849, %v848
        %v862 = vpack.c.b16 %v851, %v850
        %v863 = vpack.c.b16 %v853, %v852
        %v864 = vpack.c.b16 %v855, %v854
        %v865 = vpack.c.b16 %v857, %v856
        %874 = vmatprep.subr.bf16.mxu0 0
        %875 = vmatpush1.bf16.msra.mxu0 %v858
        %876 = vmatprep.subr.bf16.mxu0 0
        %877 = vmatpush1.bf16.msra.mxu0 %v859
        %878 = vmatprep.subr.bf16.mxu0 0
        %879 = vmatpush1.bf16.msra.mxu0 %v860
        %880 = vmatprep.subr.bf16.mxu0 0
        %881 = vmatpush1.bf16.msra.mxu0 %v861
        %882 = vmatprep.subr.bf16.mxu0 0
        %883 = vmatpush1.bf16.msra.mxu0 %v862
        %884 = vmatprep.subr.bf16.mxu0 0
        %885 = vmatpush1.bf16.msra.mxu0 %v863
        %886 = vmatprep.subr.bf16.mxu0 0
        %887 = vmatpush1.bf16.msra.mxu0 %v864
        %888 = vmatprep.subr.bf16.mxu0 0
        %889 = vmatpush1.bf16.msra.mxu0 %v865
        %890 = vmatprep.subr.bf16.mxu0 0
        %891 = vmatpush1.bf16.msra.mxu0 0
        %892 = vmatprep.subr.bf16.mxu0 0
        %893 = vmatpush1.bf16.msra.mxu0 0
        %894 = vmatprep.subr.bf16.mxu0 0
        %895 = vmatpush1.bf16.msra.mxu0 0
        %896 = vmatprep.subr.bf16.mxu0 0
        %897 = vmatpush1.bf16.msra.mxu0 0
        %898 = vmatprep.subr.bf16.mxu0 0
        %899 = vmatpush1.bf16.msra.mxu0 0
        %900 = vmatprep.subr.bf16.mxu0 0
        %901 = vmatpush1.bf16.msra.mxu0 0
        %902 = vmatprep.subr.bf16.mxu0 0
        %903 = vmatpush1.bf16.msra.mxu0 0
        %904 = vmatprep.subr.bf16.mxu0 0
        %905 = vmatpush1.bf16.msra.mxu0 0
        %906 = vmatprep.mubr.bf16.mxu0 0
        %907 = vmatmul.mubr.bf16.gmra.mrb[0].mxu0 %v800
        %v908 = vpop.f32.mrb[0].mxu0
        %v909 = vadd.f32 %v824, %v908
        %v910 = vpop.f32.mrb[0].mxu0
        %v911 = vpop.f32.mrb[0].mxu0
        %v912 = vpop.f32.mrb[0].mxu0
        %913 = vdwg.mxu0
        %v914 = vmax.f32 %v909, 0.0
        %v915 = vpack.c.bf16 %v914, %v914
        %s916 = scalar_lea.vmem [#allocation8], 64
        %v917 = vld [vmem:[%s916] sm:$0xf]
        %v918 = vld [vmem:[%s916 + $0x4] sm:$0xf]
        %v919 = vld [vmem:[%s916 + $0x8] sm:$0xf]
        %v920 = vld [vmem:[%s916 + $0xc] sm:$0xf]
        %v921 = vld [vmem:[%s916 + $0x10] sm:$0xf]
        %v922 = vld [vmem:[%s916 + $0x14] sm:$0xf]
        %v923 = vld [vmem:[%s916 + $0x18] sm:$0xf]
        %v924 = vld [vmem:[%s916 + $0x1c] sm:$0xf]
        %v925 = vld [vmem:[%s916 + $0x20] sm:$0xf]
        %v926 = vld [vmem:[%s916 + $0x24] sm:$0xf]
        %v927 = vld [vmem:[%s916 + $0x28] sm:$0xf]
        %v928 = vld [vmem:[%s916 + $0x2c] sm:$0xf]
        %v929 = vld [vmem:[%s916 + $0x30] sm:$0xf]
        %v930 = vld [vmem:[%s916 + $0x34] sm:$0xf]
        %v931 = vld [vmem:[%s916 + $0x38] sm:$0xf]
        %v932 = vld [vmem:[%s916 + $0x3c] sm:$0xf]
        %v949 = vunpack.c.l.b16 %v917
        %v950 = vunpack.c.l.b16 %v918
        %v951 = vunpack.c.l.b16 %v919
        %v952 = vunpack.c.l.b16 %v920
        %v953 = vunpack.c.l.b16 %v921
        %v954 = vunpack.c.l.b16 %v922
        %v955 = vunpack.c.l.b16 %v923
        %v956 = vunpack.c.l.b16 %v924
        %v957 = vunpack.c.l.b16 %v925
        %v958 = vunpack.c.l.b16 %v926
        %v959 = vunpack.c.l.b16 %v927
        %v960 = vunpack.c.l.b16 %v928
        %v961 = vunpack.c.l.b16 %v929
        %v962 = vunpack.c.l.b16 %v930
        %v963 = vunpack.c.l.b16 %v931
        %v964 = vunpack.c.l.b16 %v932
        %v965 = vpack.c.b16 %v950, %v949
        %v966 = vpack.c.b16 %v952, %v951
        %v967 = vpack.c.b16 %v954, %v953
        %v968 = vpack.c.b16 %v956, %v955
        %v969 = vpack.c.b16 %v958, %v957
        %v970 = vpack.c.b16 %v960, %v959
        %v971 = vpack.c.b16 %v962, %v961
        %v972 = vpack.c.b16 %v964, %v963
        %981 = vmatprep.subr.bf16.mxu0 0
        %982 = vmatpush1.bf16.msra.mxu0 %v965
        %983 = vmatprep.subr.bf16.mxu0 0
        %984 = vmatpush1.bf16.msra.mxu0 %v966
        %985 = vmatprep.subr.bf16.mxu0 0
        %986 = vmatpush1.bf16.msra.mxu0 %v967
        %987 = vmatprep.subr.bf16.mxu0 0
        %988 = vmatpush1.bf16.msra.mxu0 %v968
        %989 = vmatprep.subr.bf16.mxu0 0
        %990 = vmatpush1.bf16.msra.mxu0 %v969
        %991 = vmatprep.subr.bf16.mxu0 0
        %992 = vmatpush1.bf16.msra.mxu0 %v970
        %993 = vmatprep.subr.bf16.mxu0 0
        %994 = vmatpush1.bf16.msra.mxu0 %v971
        %995 = vmatprep.subr.bf16.mxu0 0
        %996 = vmatpush1.bf16.msra.mxu0 %v972
        %997 = vmatprep.subr.bf16.mxu0 0
        %998 = vmatpush1.bf16.msra.mxu0 0
        %999 = vmatprep.subr.bf16.mxu0 0
        %1000 = vmatpush1.bf16.msra.mxu0 0
        %1001 = vmatprep.subr.bf16.mxu0 0
        %1002 = vmatpush1.bf16.msra.mxu0 0
        %1003 = vmatprep.subr.bf16.mxu0 0
        %1004 = vmatpush1.bf16.msra.mxu0 0
        %1005 = vmatprep.subr.bf16.mxu0 0
        %1006 = vmatpush1.bf16.msra.mxu0 0
        %1007 = vmatprep.subr.bf16.mxu0 0
        %1008 = vmatpush1.bf16.msra.mxu0 0
        %1009 = vmatprep.subr.bf16.mxu0 0
        %1010 = vmatpush1.bf16.msra.mxu0 0
        %1011 = vmatprep.subr.bf16.mxu0 0
        %1012 = vmatpush1.bf16.msra.mxu0 0
        %1013 = vmatprep.mubr.bf16.mxu0 0
        %1014 = vmatmul.mubr.bf16.gmra.mrb[0].mxu0 %v915
        %v1015 = vpop.f32.mrb[0].mxu0
        %v1016 = vadd.f32 0.0, %v1015
        %v1017 = vpop.f32.mrb[0].mxu0
        %v1018 = vpop.f32.mrb[0].mxu0
        %v1019 = vpop.f32.mrb[0].mxu0
        %1020 = vdwg.mxu0
        %v1021 = vadd.f32 %v799, %v1016
        %s1022 = scalar_lea.vmem %s6, 1
        %v1023 = vld [vmem:[%s1022] sm:$0x1]
        %v1025 = vlaneseq
        %v1026 = vshrl.u32 %v1025, 7
        %v1027 = vsub.s32 0, %v1026
        %v1028 = vrot.slane %v1023, %v1027
        %v1030 = vadd.f32 %v1021, %v1028
        %v1031 = vld [vmem:[%s7] sm:$0x1]
        %v1032 = vld [vmem:[%s8] sm:$0x1]
        %1033 = vadd.xlane.f32.xlu0 %v1030
        %v1034 = vpop.xlane.xlu0 %1033
        %v1035 = vmul.f32 %v1034, 0.03125
        %v1036 = vmul.f32 %v1030, %v1030
        %1037 = vadd.xlane.f32.xlu0 %v1036
        %v1038 = vpop.xlane.xlu0 %1037
        %v1039 = vmul.f32 %v1038, 0.03125
        %v1040 = vmul.f32 %v1035, %v1035
        %v1041 = vsub.f32 %v1039, %v1040
        %v1042 = vmax.f32 %v1041, 0.0
        %v1043 = vsub.f32 %v1030, %v1035
        %v1044 = vadd.f32 %v1042, 1e-05
        %v1045 = vrsqrt.pop %v1044
        %v1046 = vmul.f32 %v1043, %v1045
        %v1048 = vlaneseq
        %v1049 = vshrl.u32 %v1048, 7
        %v1050 = vsub.s32 0, %v1049
        %v1051 = vrot.slane %v1031, %v1050
        %v1053 = vmul.f32 %v1046, %v1051
        %v1055 = vlaneseq
        %v1056 = vshrl.u32 %v1055, 7
        %v1057 = vsub.s32 0, %v1056
        %v1058 = vrot.slane %v1032, %v1057
        %v1060 = vadd.f32 %v1053, %v1058
        %v1061 = vpack.c.bf16 %v1060, %v1060
        %v1062 = vld [vmem:[#allocation10] sm:$0xf]
        %v1063 = vld [vmem:[#allocation10 + $0x4] sm:$0xf]
        %v1064 = vld [vmem:[#allocation10 + $0x8] sm:$0xf]
        %v1065 = vld [vmem:[#allocation10 + $0xc] sm:$0xf]
        %v1066 = vld [vmem:[#allocation10 + $0x10] sm:$0xf]
        %v1067 = vld [vmem:[#allocation10 + $0x14] sm:$0xf]
        %v1068 = vld [vmem:[#allocation10 + $0x18] sm:$0xf]
        %v1069 = vld [vmem:[#allocation10 + $0x1c] sm:$0xf]
        %v1070 = vld [vmem:[#allocation10 + $0x20] sm:$0xf]
        %v1071 = vld [vmem:[#allocation10 + $0x24] sm:$0xf]
        %v1072 = vld [vmem:[#allocation10 + $0x28] sm:$0xf]
        %v1073 = vld [vmem:[#allocation10 + $0x2c] sm:$0xf]
        %v1074 = vld [vmem:[#allocation10 + $0x30] sm:$0xf]
        %v1075 = vld [vmem:[#allocation10 + $0x34] sm:$0xf]
        %v1076 = vld [vmem:[#allocation10 + $0x38] sm:$0xf]
        %v1077 = vld [vmem:[#allocation10 + $0x3c] sm:$0xf]
        %v1078 = vld [vmem:[%s10] sm:$0x1]
        %v1080 = vlaneseq
        %v1081 = vshrl.u32 %v1080, 7
        %v1082 = vsub.s32 0, %v1081
        %v1083 = vrot.slane %v1078, %v1082
        %v1101 = vunpack.c.l.b16 %v1062
        %v1102 = vunpack.c.l.b16 %v1063
        %v1103 = vunpack.c.l.b16 %v1064
        %v1104 = vunpack.c.l.b16 %v1065
        %v1105 = vunpack.c.l.b16 %v1066
        %v1106 = vunpack.c.l.b16 %v1067
        %v1107 = vunpack.c.l.b16 %v1068
        %v1108 = vunpack.c.l.b16 %v1069
        %v1109 = vunpack.c.l.b16 %v1070
        %v1110 = vunpack.c.l.b16 %v1071
        %v1111 = vunpack.c.l.b16 %v1072
        %v1112 = vunpack.c.l.b16 %v1073
        %v1113 = vunpack.c.l.b16 %v1074
        %v1114 = vunpack.c.l.b16 %v1075
        %v1115 = vunpack.c.l.b16 %v1076
        %v1116 = vunpack.c.l.b16 %v1077
        %v1117 = vpack.c.b16 %v1102, %v1101
        %v1118 = vpack.c.b16 %v1104, %v1103
        %v1119 = vpack.c.b16 %v1106, %v1105
        %v1120 = vpack.c.b16 %v1108, %v1107
        %v1121 = vpack.c.b16 %v1110, %v1109
        %v1122 = vpack.c.b16 %v1112, %v1111
        %v1123 = vpack.c.b16 %v1114, %v1113
        %v1124 = vpack.c.b16 %v1116, %v1115
        %1133 = vmatprep.subr.bf16.mxu0 0
        %1134 = vmatpush1.bf16.msra.mxu0 %v1117
        %1135 = vmatprep.subr.bf16.mxu0 0
        %1136 = vmatpush1.bf16.msra.mxu0 %v1118
        %1137 = vmatprep.subr.bf16.mxu0 0
        %1138 = vmatpush1.bf16.msra.mxu0 %v1119
        %1139 = vmatprep.subr.bf16.mxu0 0
        %1140 = vmatpush1.bf16.msra.mxu0 %v1120
        %1141 = vmatprep.subr.bf16.mxu0 0
        %1142 = vmatpush1.bf16.msra.mxu0 %v1121
        %1143 = vmatprep.subr.bf16.mxu0 0
        %1144 = vmatpush1.bf16.msra.mxu0 %v1122
        %1145 = vmatprep.subr.bf16.mxu0 0
        %1146 = vmatpush1.bf16.msra.mxu0 %v1123
        %1147 = vmatprep.subr.bf16.mxu0 0
        %1148 = vmatpush1.bf16.msra.mxu0 %v1124
        %1149 = vmatprep.subr.bf16.mxu0 0
        %1150 = vmatpush1.bf16.msra.mxu0 0
        %1151 = vmatprep.subr.bf16.mxu0 0
        %1152 = vmatpush1.bf16.msra.mxu0 0
        %1153 = vmatprep.subr.bf16.mxu0 0
        %1154 = vmatpush1.bf16.msra.mxu0 0
        %1155 = vmatprep.subr.bf16.mxu0 0
        %1156 = vmatpush1.bf16.msra.mxu0 0
        %1157 = vmatprep.subr.bf16.mxu0 0
        %1158 = vmatpush1.bf16.msra.mxu0 0
        %1159 = vmatprep.subr.bf16.mxu0 0
        %1160 = vmatpush1.bf16.msra.mxu0 0
        %1161 = vmatprep.subr.bf16.mxu0 0
        %1162 = vmatpush1.bf16.msra.mxu0 0
        %1163 = vmatprep.subr.bf16.mxu0 0
        %1164 = vmatpush1.bf16.msra.mxu0 0
        %1165 = vmatprep.mubr.bf16.mxu0 0
        %1166 = vmatmul.mubr.bf16.gmra.mrb[0].mxu0 %v1061
        %v1167 = vpop.f32.mrb[0].mxu0
        %v1168 = vadd.f32 %v1083, %v1167
        %v1169 = vpop.f32.mrb[0].mxu0
        %v1170 = vpop.f32.mrb[0].mxu0
        %v1171 = vpop.f32.mrb[0].mxu0
        %1172 = vdwg.mxu0
        %1173 = vst [vmem:[%s459] sm:$0xff] %v1168
        %s1174 = sand.u32 %s274, 1
        %s1175 = scalar_lea.sflag [#allocation4], %s1174
        %s1176 = sand.u32 %s274, 1
        %s1177 = smul.addr %s1176, 8
        %s1178 = scalar_lea.vmem [#allocation11], %s1177
        // Predicated region
        $region85: #{tpu_custom_call.1} parent=63 // pred_check
          %p1179 = pneg %p284
        $region86: #{tpu_custom_call.1} parent=63 // pred_check_branch
          %1181 = sbr.rel (%p1179) target = $region88
        $region87: #{tpu_custom_call.1} parent=63 // pred_region
          %s1183 = ssub.s32 128, 128
          %1184 = vsyncadd %s1175, %s1183
          %s1185 = smul.addr %s30, 128
          %s1186 = scalar_lea.hbm %s11, %s1185
          %s1188 = sshll.u32 %s1178, 4
          %s1189 = int_to_ptr.vmem [resolvable:$true] %s1188
          %1191 = dma.vmem_to_hbm [thread:$0]  %s1189, 128, %s1186, %s1175
        $region88: #{tpu_custom_call.1} parent=63 // pred_fallthru
          _
      $region64: #{tpu_custom_call.1} parent=5 // pred_fallthru
        _
      %p1192 = scmp.le.s32.totalorder 2, %s25
      // Predicated region
      $region89: #{tpu_custom_call.1} parent=5 // pred_check
        %p1193 = pneg %p1192
      $region90: #{tpu_custom_call.1} parent=5 // pred_check_branch
        %1195 = sbr.rel (%p1193) target = $region92
      $region91: #{tpu_custom_call.1} parent=5 // pred_region
        %s1196 = ssub.s32 %s25, 2
        // Predicated region
        $region93: #{tpu_custom_call.1} parent=91 // pred_check
          %p1197 = pneg %p290
        $region94: #{tpu_custom_call.1} parent=91 // pred_check_branch
          %1199 = sbr.rel (%p1197) target = $region96
        $region95: #{tpu_custom_call.1} parent=91 // pred_region
          %s1200 = sand.u32 %s275, 1
          %s1201 = scalar_lea.sflag [#allocation4], %s1200
          %s1202 = sand.u32 %s275, 1
          %s1203 = smul.addr %s1202, 8
          %s1204 = scalar_lea.vmem [#allocation11], %s1203
          %1205 = dma.done %s1201, 128
        $region96: #{tpu_custom_call.1} parent=91 // pred_fallthru
          _
      $region92: #{tpu_custom_call.1} parent=5 // pred_fallthru
        _
    $region6: #{tpu_custom_call.1} parent=1 // loop_footer
      %s29 = sadd.s32 1, %s25
    $region7: #{tpu_custom_call.1} parent=1 // loop_footer_branch
      %24 = sbr.rel target = $region3
    $region8: #{tpu_custom_call.1} parent=1 // loop_exit
      _
    %1206 = vsyncpa [#allocation3], 1
    %s1207 = scalar_lea.sflag [#allocation3], 1
    %1208 = vsyncpa %s1207, 1
    %1209 = vsyncpa [#allocation6], 1
    %1210 = vsyncpa [#allocation9], 1
    %1211 = vsyncpa [#allocation4], 1
    %s1212 = scalar_lea.sflag [#allocation4], 1
    %1213 = vsyncpa %s1212, 1

</llo_original>
